<compile_context>
chip_gen: v7x
topology: tpu7x:2x2x1
jax: 0.10.0
libtpu: 0.0.40
codegen_flags: <defaults>
</compile_context>

<pallas_src>
import math

import jax
import jax.numpy as jnp
from jax.experimental import pallas as pl
from jax.experimental.pallas import tpu as pltpu

N_EMBD = 128
NUM_HEADS = 4
HEAD_DIM = N_EMBD // NUM_HEADS
LN_EPS = 1e-5


def _cdiv(a, b):
    return -(-a // b)


def _layer_norm_fused(v, g, b):
    # Independent sum(x) / sum(x*x) reductions (can overlap on the XLU units),
    # f32 accumulation throughout.
    n = v.shape[-1]
    inv_n = 1.0 / n
    s1 = jnp.sum(v, axis=-1, keepdims=True)
    s2 = jnp.sum(v * v, axis=-1, keepdims=True)
    mu = s1 * inv_n
    var = s2 * inv_n - mu * mu
    return (v - mu) * jax.lax.rsqrt(var + LN_EPS) * g + b


def transformer_block_kernel(
    x_ref,                    # (Bt, S, E) f32 or bf16
    ln1g_ref, ln1b_ref,       # (1, E) f32
    win_t_ref, bin_ref,       # (E, 3E) bf16 (Q rows pre-scaled), (1, 3E) f32
    wout_t_ref, bout_ref,     # (E, E) bf16, (1, E) f32
    ln2g_ref, ln2b_ref,       # (1, E) f32
    w1_t_ref, b1_ref,         # (E, 4E) bf16, (1, 4E) f32
    w2_t_ref, b2_ref,         # (4E, E) bf16, (1, E) f32
    o_ref,                    # (Bt, S, E) same dtype as x
    attn_scr,                 # VMEM scratch (Bt, S, E) f32
):
    Bt, S, E = x_ref.shape
    x = x_ref[...].astype(jnp.float32).reshape(Bt * S, E)   # fold batch into M

    # ---- pre-LN + multi-head self-attention (dropout: eval-mode no-op) ----
    h = _layer_norm_fused(x, ln1g_ref[...], ln1b_ref[...])
    qkv = jnp.dot(h.astype(jnp.bfloat16), win_t_ref[...],
                  preferred_element_type=jnp.float32) + bin_ref[...]   # (Bt*S, 3E)

    # 1/sqrt(head_dim) already folded into the Q projection on the host
    q = qkv[:, 0:E].reshape(Bt, S, E).astype(jnp.bfloat16)
    k = qkv[:, E:2 * E].reshape(Bt, S, E).astype(jnp.bfloat16)
    v = qkv[:, 2 * E:3 * E].reshape(Bt, S, E).astype(jnp.bfloat16)

    # Per-head attention; each head's output is stored at its static 32-lane
    # offset in a VMEM scratch (masked vst), avoiding the lane-concat relayout.
    for hh in range(NUM_HEADS):
        lo = hh * HEAD_DIM
        qh = q[:, :, lo:lo + HEAD_DIM]
        kh = k[:, :, lo:lo + HEAD_DIM]
        vh = v[:, :, lo:lo + HEAD_DIM]
        s = jnp.einsum('bqd,bkd->bqk', qh, kh,
                       preferred_element_type=jnp.float32)            # (Bt, S, S)
        s = s - jnp.max(s, axis=-1, keepdims=True)
        p = jnp.exp(s)
        p = p * pl.reciprocal(jnp.sum(p, axis=-1, keepdims=True), approx=True)
        attn_scr[:, :, lo:lo + HEAD_DIM] = jnp.einsum(
            'bqk,bkd->bqd', p.astype(jnp.bfloat16), vh,
            preferred_element_type=jnp.float32)

    attn = attn_scr[...].reshape(Bt * S, E)
    attn = jnp.dot(attn.astype(jnp.bfloat16), wout_t_ref[...],
                   preferred_element_type=jnp.float32) + bout_ref[...]

    x1 = x + attn

    # ---- pre-LN + feed-forward ----
    h2 = _layer_norm_fused(x1, ln2g_ref[...], ln2b_ref[...])
    f = jnp.dot(h2.astype(jnp.bfloat16), w1_t_ref[...],
                preferred_element_type=jnp.float32) + b1_ref[...]
    f = jnp.maximum(f, 0.0)
    f = jnp.dot(f.astype(jnp.bfloat16), w2_t_ref[...],
                preferred_element_type=jnp.float32) + b2_ref[...]

    o_ref[...] = (x1 + f).reshape(Bt, S, E).astype(o_ref.dtype)


def prepare_params(params):
    """One-time host-side prep: fold 1/sqrt(head_dim) into the Q projection,
    pre-transpose every weight to (in, out), cast matmul weights to bf16."""
    (ln1g, ln1b, win, bin_, wout, bout, ln2g, ln2b, w1, b1, w2, b2) = params
    scale = 1.0 / math.sqrt(HEAD_DIM)
    win = win.at[0:N_EMBD, :].multiply(scale)
    bin_ = bin_.at[:, 0:N_EMBD].multiply(scale)
    return (
        ln1g, ln1b,
        jnp.asarray(win.T, jnp.bfloat16), bin_,
        jnp.asarray(wout.T, jnp.bfloat16), bout,
        ln2g, ln2b,
        jnp.asarray(w1.T, jnp.bfloat16), b1,
        jnp.asarray(w2.T, jnp.bfloat16), b2,
    )


def _vmem_budget():
    """Generation-aware (target_rows, vmem_limit_bytes)."""
    try:
        cap = pltpu.get_tpu_info().vmem_capacity_bytes
    except Exception:
        cap = 64 << 20  # conservative default (v7x-sized)
    if cap >= (100 << 20):          # v5e / v6e: 128 MiB VMEM per TensorCore
        return 2048, 96 << 20
    return 1024, 40 << 20           # v7x: 64 MiB VMEM per TensorCore


def _choose_tiling(B, S):
    """Pick (bt, grid, B_pad): big M per step under the VMEM budget, even
    grid >= 2 so the parallel grid shards across both v7x TensorCores, and
    zero-padding of B instead of degenerating to bt=1 for awkward B."""
    target_rows, vmem_limit = _vmem_budget()
    max_bt = max(1, target_rows // S)
    grid = _cdiv(B, max_bt)          # minimum steps under the VMEM budget
    if B >= 2:
        grid = max(grid, 2)          # keep both v7x TensorCores busy
        if grid % 2:
            grid += 1                # even split across the 2 TCs
    grid = min(grid, B)              # never more steps than batch items
    bt = _cdiv(B, grid)
    B_pad = bt * grid
    return bt, grid, B_pad, vmem_limit


@jax.jit
def transformer_block(x, prepped_params):
    B, S, E = x.shape
    assert E == N_EMBD

    bt, grid, B_pad, vmem_limit = _choose_tiling(B, S)

    x_in = x if B_pad == B else jnp.pad(x, ((0, B_pad - B), (0, 0), (0, 0)))

    def rep(a):
        # full-array block, constant across the grid (fetched once)
        return pl.BlockSpec(a.shape, lambda g: (0,) * a.ndim)

    (ln1g, ln1b, win_t, bin_, wout_t, bout,
     ln2g, ln2b, w1_t, b1, w2_t, b2) = prepped_params

    out = pl.pallas_call(
        transformer_block_kernel,
        out_shape=jax.ShapeDtypeStruct((B_pad, S, E), x.dtype),
        grid=(grid,),
        in_specs=[
            pl.BlockSpec((bt, S, E), lambda g: (g, 0, 0)),
            rep(ln1g), rep(ln1b),
            rep(win_t), rep(bin_),
            rep(wout_t), rep(bout),
            rep(ln2g), rep(ln2b),
            rep(w1_t), rep(b1),
            rep(w2_t), rep(b2),
        ],
        out_specs=pl.BlockSpec((bt, S, E), lambda g: (g, 0, 0)),
        scratch_shapes=[pltpu.VMEM((bt, S, E), jnp.float32)],
        compiler_params=pltpu.CompilerParams(
            dimension_semantics=("parallel",),
            vmem_limit_bytes=vmem_limit),
    )(x_in, ln1g, ln1b, win_t, bin_, wout_t, bout, ln2g, ln2b, w1_t, b1, w2_t, b2)

    return out if B_pad == B else out[:B]


def init_params(key):
    E = N_EMBD
    ks = jax.random.split(key, 6)
    s = 0.02
    ln1g = jnp.ones((1, E), jnp.float32)
    ln1b = jnp.zeros((1, E), jnp.float32)
    win = (jax.random.normal(ks[0], (3 * E, E)) * s).astype(jnp.float32)
    bin_ = (jax.random.normal(ks[1], (1, 3 * E)) * s).astype(jnp.float32)
    wout = (jax.random.normal(ks[2], (E, E)) * s).astype(jnp.float32)
    bout = jnp.zeros((1, E), jnp.float32)
    ln2g = jnp.ones((1, E), jnp.float32)
    ln2b = jnp.zeros((1, E), jnp.float32)
    w1 = (jax.random.normal(ks[3], (4 * E, E)) * s).astype(jnp.float32)
    b1 = (jax.random.normal(ks[4], (1, 4 * E)) * s).astype(jnp.float32)
    w2 = (jax.random.normal(ks[5], (E, 4 * E)) * s).astype(jnp.float32)
    b2 = jnp.zeros((1, E), jnp.float32)
    return (ln1g, ln1b, win, bin_, wout, bout, ln2g, ln2b, w1, b1, w2, b2)


def _layer_norm_ref(v, g, b):
    mu = jnp.mean(v, axis=-1, keepdims=True)
    var = jnp.mean((v - mu) ** 2, axis=-1, keepdims=True)
    return (v - mu) * jax.lax.rsqrt(var + LN_EPS) * g + b


def reference_block(x, params):
    (ln1g, ln1b, win, bin_, wout, bout, ln2g, ln2b, w1, b1, w2, b2) = params
    B, S, E = x.shape
    h = _layer_norm_ref(x, ln1g, ln1b)
    qkv = jnp.einsum('bse,fe->bsf', h, win) + bin_
    q, k, v = jnp.split(qkv, 3, axis=-1)
    q = q.reshape(B, S, NUM_HEADS, HEAD_DIM).transpose(0, 2, 1, 3)
    k = k.reshape(B, S, NUM_HEADS, HEAD_DIM).transpose(0, 2, 1, 3)
    v = v.reshape(B, S, NUM_HEADS, HEAD_DIM).transpose(0, 2, 1, 3)
    s = jnp.einsum('bhqd,bhkd->bhqk', q, k) / math.sqrt(HEAD_DIM)
    p = jax.nn.softmax(s, axis=-1)
    a = jnp.einsum('bhqk,bhkd->bhqd', p, v).transpose(0, 2, 1, 3).reshape(B, S, E)
    a = jnp.einsum('bse,fe->bsf', a, wout) + bout
    x1 = x + a
    h2 = _layer_norm_ref(x1, ln2g, ln2b)
    f = jnp.maximum(jnp.einsum('bse,fe->bsf', h2, w1) + b1, 0.0)
    f = jnp.einsum('bsf,ef->bse', f, w2) + b2
    return x1 + f


if __name__ == "__main__":
    key = jax.random.PRNGKey(0)
    kx, kp = jax.random.split(key)
    params = init_params(kp)
    prepped = prepare_params(params)

    # --- f32 I/O, B divides tiling ---
    B, S = 2, 8
    x = jax.random.normal(kx, (B, S, N_EMBD), dtype=jnp.float32)
    out = jax.block_until_ready(transformer_block(x, prepped))
    ref = reference_block(x, params)
    assert out.shape == (B, S, N_EMBD)
    assert jnp.allclose(out, ref, rtol=2e-2, atol=2e-2), "mismatch (f32, B=2)"

    # --- f32 I/O, awkward B exercises the zero-padding path ---
    B2 = 3
    x3 = jax.random.normal(jax.random.PRNGKey(1), (B2, S, N_EMBD), dtype=jnp.float32)
    out3 = jax.block_until_ready(transformer_block(x3, prepped))
    ref3 = reference_block(x3, params)
    assert out3.shape == (B2, S, N_EMBD)
    assert jnp.allclose(out3, ref3, rtol=2e-2, atol=2e-2), "mismatch (f32, B=3)"

    # --- bf16 I/O path (halves HBM traffic on memory-bound v6e) ---
    x_bf16 = x.astype(jnp.bfloat16)
    out_bf16 = jax.block_until_ready(transformer_block(x_bf16, prepped))
    ref_bf16 = reference_block(x_bf16.astype(jnp.float32), params)
    assert out_bf16.dtype == jnp.bfloat16
    assert jnp.allclose(out_bf16.astype(jnp.float32), ref_bf16,
                        rtol=5e-2, atol=5e-2), "mismatch (bf16 I/O)"

    print("KERNEL_OK")
</pallas_src>

<mosaic_0001>
module attributes {stable_mosaic.version = 11 : i64} {
  func.func @transformer_block_kernel(%arg0: i32, %arg1: memref<1x8x128xf32, #tpu.memory_space<vmem>>, %arg2: memref<1x128xf32, #tpu.memory_space<vmem>>, %arg3: memref<1x128xf32, #tpu.memory_space<vmem>>, %arg4: memref<128x384xbf16, #tpu.memory_space<vmem>>, %arg5: memref<1x384xf32, #tpu.memory_space<vmem>>, %arg6: memref<128x128xbf16, #tpu.memory_space<vmem>>, %arg7: memref<1x128xf32, #tpu.memory_space<vmem>>, %arg8: memref<1x128xf32, #tpu.memory_space<vmem>>, %arg9: memref<1x128xf32, #tpu.memory_space<vmem>>, %arg10: memref<128x512xbf16, #tpu.memory_space<vmem>>, %arg11: memref<1x512xf32, #tpu.memory_space<vmem>>, %arg12: memref<512x128xbf16, #tpu.memory_space<vmem>>, %arg13: memref<1x128xf32, #tpu.memory_space<vmem>>, %arg14: memref<1x8x128xf32, #tpu.memory_space<vmem>>, %arg15: memref<1x8x128xf32, #tpu.memory_space<vmem>>) attributes {dimension_semantics = [#tpu.dimension_semantics<parallel>], iteration_bounds = array<i64: 2>, scalar_prefetch = 0 : i64, scratch_operands = 1 : i64, tpu.core_type = #tpu.core_type<tc>, window_params = [{transform_indices = @transform_0, window_bounds = array<i64: 1, 8, 128>}, {pipeline_mode = #tpu.pipeline_mode<synchronous>, transform_indices = @transform_1, window_bounds = array<i64: 1, 128>}, {pipeline_mode = #tpu.pipeline_mode<synchronous>, transform_indices = @transform_2, window_bounds = array<i64: 1, 128>}, {pipeline_mode = #tpu.pipeline_mode<synchronous>, transform_indices = @transform_3, window_bounds = array<i64: 128, 384>}, {pipeline_mode = #tpu.pipeline_mode<synchronous>, transform_indices = @transform_4, window_bounds = array<i64: 1, 384>}, {pipeline_mode = #tpu.pipeline_mode<synchronous>, transform_indices = @transform_5, window_bounds = array<i64: 128, 128>}, {pipeline_mode = #tpu.pipeline_mode<synchronous>, transform_indices = @transform_6, window_bounds = array<i64: 1, 128>}, {pipeline_mode = #tpu.pipeline_mode<synchronous>, transform_indices = @transform_7, window_bounds = array<i64: 1, 128>}, {pipeline_mode = #tpu.pipeline_mode<synchronous>, transform_indices = @transform_8, window_bounds = array<i64: 1, 128>}, {pipeline_mode = #tpu.pipeline_mode<synchronous>, transform_indices = @transform_9, window_bounds = array<i64: 128, 512>}, {pipeline_mode = #tpu.pipeline_mode<synchronous>, transform_indices = @transform_10, window_bounds = array<i64: 1, 512>}, {pipeline_mode = #tpu.pipeline_mode<synchronous>, transform_indices = @transform_11, window_bounds = array<i64: 512, 128>}, {pipeline_mode = #tpu.pipeline_mode<synchronous>, transform_indices = @transform_12, window_bounds = array<i64: 1, 128>}, {transform_indices = @transform_13, window_bounds = array<i64: 1, 8, 128>}]} {
    %c0 = arith.constant 0 : index
    %c0_0 = arith.constant 0 : index
    %c0_1 = arith.constant 0 : index
    %0 = vector.load %arg1[%c0, %c0_0, %c0_1] : memref<1x8x128xf32, #tpu.memory_space<vmem>>, vector<1x8x128xf32>
    %1 = vector.shape_cast %0 : vector<1x8x128xf32> to vector<8x128xf32>
    %c0_2 = arith.constant 0 : index
    %c0_3 = arith.constant 0 : index
    %2 = vector.load %arg2[%c0_2, %c0_3] : memref<1x128xf32, #tpu.memory_space<vmem>>, vector<1x128xf32>
    %c0_4 = arith.constant 0 : index
    %c0_5 = arith.constant 0 : index
    %3 = vector.load %arg3[%c0_4, %c0_5] : memref<1x128xf32, #tpu.memory_space<vmem>>, vector<1x128xf32>
    %cst = arith.constant dense<0.000000e+00> : vector<8xf32>
    %4 = vector.multi_reduction <add>, %1, %cst [1] : vector<8x128xf32> to vector<8xf32>
    %5 = vector.shape_cast %4 : vector<8xf32> to vector<8x1xf32>
    %6 = arith.mulf %1, %1 : vector<8x128xf32>
    %cst_6 = arith.constant dense<0.000000e+00> : vector<8xf32>
    %7 = vector.multi_reduction <add>, %6, %cst_6 [1] : vector<8x128xf32> to vector<8xf32>
    %8 = vector.shape_cast %7 : vector<8xf32> to vector<8x1xf32>
    %cst_7 = arith.constant 7.812500e-03 : f32
    %9 = vector.broadcast %cst_7 : f32 to vector<8x1xf32>
    %10 = arith.mulf %5, %9 : vector<8x1xf32>
    %cst_8 = arith.constant 7.812500e-03 : f32
    %11 = vector.broadcast %cst_8 : f32 to vector<8x1xf32>
    %12 = arith.mulf %8, %11 : vector<8x1xf32>
    %13 = arith.mulf %10, %10 : vector<8x1xf32>
    %14 = arith.subf %12, %13 : vector<8x1xf32>
    %15 = vector.broadcast %10 : vector<8x1xf32> to vector<8x128xf32>
    %16 = arith.subf %1, %15 : vector<8x128xf32>
    %cst_9 = arith.constant 9.99999974E-6 : f32
    %17 = vector.broadcast %cst_9 : f32 to vector<8x1xf32>
    %18 = arith.addf %14, %17 : vector<8x1xf32>
    %19 = math.rsqrt %18 : vector<8x1xf32>
    %20 = vector.broadcast %19 : vector<8x1xf32> to vector<8x128xf32>
    %21 = arith.mulf %16, %20 : vector<8x128xf32>
    %22 = vector.broadcast %2 : vector<1x128xf32> to vector<8x128xf32>
    %23 = arith.mulf %21, %22 : vector<8x128xf32>
    %24 = vector.broadcast %3 : vector<1x128xf32> to vector<8x128xf32>
    %25 = arith.addf %23, %24 : vector<8x128xf32>
    %26 = arith.truncf %25 : vector<8x128xf32> to vector<8x128xbf16>
    %c0_10 = arith.constant 0 : index
    %c0_11 = arith.constant 0 : index
    %27 = vector.load %arg4[%c0_10, %c0_11] : memref<128x384xbf16, #tpu.memory_space<vmem>>, vector<128x384xbf16>
    %cst_12 = arith.constant dense<0.000000e+00> : vector<8x384xf32>
    %28 = tpu.matmul %26, %27, %cst_12 {dimension_numbers = #tpu.dot_dimension_numbers<[1], [0], [0], [1], [0, 0, 1, 1], [], []>} : vector<8x128xbf16>, vector<128x384xbf16>, vector<8x384xf32> -> vector<8x384xf32>
    %c0_13 = arith.constant 0 : index
    %c0_14 = arith.constant 0 : index
    %29 = vector.load %arg5[%c0_13, %c0_14] : memref<1x384xf32, #tpu.memory_space<vmem>>, vector<1x384xf32>
    %30 = vector.broadcast %29 : vector<1x384xf32> to vector<8x384xf32>
    %31 = arith.addf %28, %30 : vector<8x384xf32>
    %32 = vector.extract_strided_slice %31 {offsets = [0, 0], sizes = [8, 128], strides = [1, 1]} : vector<8x384xf32> to vector<8x128xf32>
    %33 = vector.shape_cast %32 : vector<8x128xf32> to vector<1x8x128xf32>
    %34 = arith.truncf %33 : vector<1x8x128xf32> to vector<1x8x128xbf16>
    %35 = vector.extract_strided_slice %31 {offsets = [0, 128], sizes = [8, 128], strides = [1, 1]} : vector<8x384xf32> to vector<8x128xf32>
    %36 = vector.shape_cast %35 : vector<8x128xf32> to vector<1x8x128xf32>
    %37 = arith.truncf %36 : vector<1x8x128xf32> to vector<1x8x128xbf16>
    %38 = vector.extract_strided_slice %31 {offsets = [0, 256], sizes = [8, 128], strides = [1, 1]} : vector<8x384xf32> to vector<8x128xf32>
    %39 = vector.shape_cast %38 : vector<8x128xf32> to vector<1x8x128xf32>
    %40 = arith.truncf %39 : vector<1x8x128xf32> to vector<1x8x128xbf16>
    %41 = vector.extract_strided_slice %34 {offsets = [0, 0, 0], sizes = [1, 8, 32], strides = [1, 1, 1]} : vector<1x8x128xbf16> to vector<1x8x32xbf16>
    %42 = vector.extract_strided_slice %37 {offsets = [0, 0, 0], sizes = [1, 8, 32], strides = [1, 1, 1]} : vector<1x8x128xbf16> to vector<1x8x32xbf16>
    %43 = vector.extract_strided_slice %40 {offsets = [0, 0, 0], sizes = [1, 8, 32], strides = [1, 1, 1]} : vector<1x8x128xbf16> to vector<1x8x32xbf16>
    "tpu.trace_start"() <{level = 10 : i32, message = "bqd,bkd->bqk"}> : () -> ()
    %cst_15 = arith.constant dense<0.000000e+00> : vector<1x8x8xf32>
    %44 = tpu.matmul %41, %42, %cst_15 {dimension_numbers = #tpu.dot_dimension_numbers<[2], [2], [1], [1], [0, 0, 0, 1, 1, 1], [0], [0]>} : vector<1x8x32xbf16>, vector<1x8x32xbf16>, vector<1x8x8xf32> -> vector<1x8x8xf32>
    "tpu.trace_stop"() : () -> ()
    %cst_16 = arith.constant dense<0xFF800000> : vector<1x8xf32>
    %45 = vector.multi_reduction <maximumf>, %44, %cst_16 [2] : vector<1x8x8xf32> to vector<1x8xf32>
    %46 = vector.shape_cast %45 : vector<1x8xf32> to vector<1x8x1xf32>
    %47 = vector.broadcast %46 : vector<1x8x1xf32> to vector<1x8x8xf32>
    %48 = arith.subf %44, %47 : vector<1x8x8xf32>
    %49 = math.exp %48 : vector<1x8x8xf32>
    %cst_17 = arith.constant dense<0.000000e+00> : vector<1x8xf32>
    %50 = vector.multi_reduction <add>, %49, %cst_17 [2] : vector<1x8x8xf32> to vector<1x8xf32>
    %51 = vector.shape_cast %50 : vector<1x8xf32> to vector<1x8x1xf32>
    %52 = tpu.reciprocal %51 {approx = true} : vector<1x8x1xf32> -> vector<1x8x1xf32>
    %53 = vector.broadcast %52 : vector<1x8x1xf32> to vector<1x8x8xf32>
    %54 = arith.mulf %49, %53 : vector<1x8x8xf32>
    %55 = arith.truncf %54 : vector<1x8x8xf32> to vector<1x8x8xbf16>
    "tpu.trace_start"() <{level = 10 : i32, message = "bqk,bkd->bqd"}> : () -> ()
    %cst_18 = arith.constant dense<0.000000e+00> : vector<1x8x32xf32>
    %56 = tpu.matmul %55, %43, %cst_18 {dimension_numbers = #tpu.dot_dimension_numbers<[2], [1], [1], [2], [0, 0, 0, 1, 1, 2], [0], [0]>} : vector<1x8x8xbf16>, vector<1x8x32xbf16>, vector<1x8x32xf32> -> vector<1x8x32xf32>
    "tpu.trace_stop"() : () -> ()
    %c0_19 = arith.constant 0 : index
    %c0_20 = arith.constant 0 : index
    %c0_21 = arith.constant 0 : index
    %57 = vector.load %arg15[%c0_19, %c0_20, %c0_21] : memref<1x8x128xf32, #tpu.memory_space<vmem>>, vector<1x8x32xf32>
    tpu.vector_store %arg15[%c0_19, %c0_20, %c0_21], %56 {strides = array<i32>} : memref<1x8x128xf32, #tpu.memory_space<vmem>>, vector<1x8x32xf32>,
    %58 = vector.extract_strided_slice %34 {offsets = [0, 0, 32], sizes = [1, 8, 32], strides = [1, 1, 1]} : vector<1x8x128xbf16> to vector<1x8x32xbf16>
    %59 = vector.extract_strided_slice %37 {offsets = [0, 0, 32], sizes = [1, 8, 32], strides = [1, 1, 1]} : vector<1x8x128xbf16> to vector<1x8x32xbf16>
    %60 = vector.extract_strided_slice %40 {offsets = [0, 0, 32], sizes = [1, 8, 32], strides = [1, 1, 1]} : vector<1x8x128xbf16> to vector<1x8x32xbf16>
    "tpu.trace_start"() <{level = 10 : i32, message = "bqd,bkd->bqk"}> : () -> ()
    %cst_22 = arith.constant dense<0.000000e+00> : vector<1x8x8xf32>
    %61 = tpu.matmul %58, %59, %cst_22 {dimension_numbers = #tpu.dot_dimension_numbers<[2], [2], [1], [1], [0, 0, 0, 1, 1, 1], [0], [0]>} : vector<1x8x32xbf16>, vector<1x8x32xbf16>, vector<1x8x8xf32> -> vector<1x8x8xf32>
    "tpu.trace_stop"() : () -> ()
    %cst_23 = arith.constant dense<0xFF800000> : vector<1x8xf32>
    %62 = vector.multi_reduction <maximumf>, %61, %cst_23 [2] : vector<1x8x8xf32> to vector<1x8xf32>
    %63 = vector.shape_cast %62 : vector<1x8xf32> to vector<1x8x1xf32>
    %64 = vector.broadcast %63 : vector<1x8x1xf32> to vector<1x8x8xf32>
    %65 = arith.subf %61, %64 : vector<1x8x8xf32>
    %66 = math.exp %65 : vector<1x8x8xf32>
    %cst_24 = arith.constant dense<0.000000e+00> : vector<1x8xf32>
    %67 = vector.multi_reduction <add>, %66, %cst_24 [2] : vector<1x8x8xf32> to vector<1x8xf32>
    %68 = vector.shape_cast %67 : vector<1x8xf32> to vector<1x8x1xf32>
    %69 = tpu.reciprocal %68 {approx = true} : vector<1x8x1xf32> -> vector<1x8x1xf32>
    %70 = vector.broadcast %69 : vector<1x8x1xf32> to vector<1x8x8xf32>
    %71 = arith.mulf %66, %70 : vector<1x8x8xf32>
    %72 = arith.truncf %71 : vector<1x8x8xf32> to vector<1x8x8xbf16>
    "tpu.trace_start"() <{level = 10 : i32, message = "bqk,bkd->bqd"}> : () -> ()
    %cst_25 = arith.constant dense<0.000000e+00> : vector<1x8x32xf32>
    %73 = tpu.matmul %72, %60, %cst_25 {dimension_numbers = #tpu.dot_dimension_numbers<[2], [1], [1], [2], [0, 0, 0, 1, 1, 2], [0], [0]>} : vector<1x8x8xbf16>, vector<1x8x32xbf16>, vector<1x8x32xf32> -> vector<1x8x32xf32>
    "tpu.trace_stop"() : () -> ()
    %c0_26 = arith.constant 0 : index
    %c0_27 = arith.constant 0 : index
    %c32 = arith.constant 32 : index
    %74 = vector.load %arg15[%c0_26, %c0_27, %c32] : memref<1x8x128xf32, #tpu.memory_space<vmem>>, vector<1x8x32xf32>
    tpu.vector_store %arg15[%c0_26, %c0_27, %c32], %73 {strides = array<i32>} : memref<1x8x128xf32, #tpu.memory_space<vmem>>, vector<1x8x32xf32>,
    %75 = vector.extract_strided_slice %34 {offsets = [0, 0, 64], sizes = [1, 8, 32], strides = [1, 1, 1]} : vector<1x8x128xbf16> to vector<1x8x32xbf16>
    %76 = vector.extract_strided_slice %37 {offsets = [0, 0, 64], sizes = [1, 8, 32], strides = [1, 1, 1]} : vector<1x8x128xbf16> to vector<1x8x32xbf16>
    %77 = vector.extract_strided_slice %40 {offsets = [0, 0, 64], sizes = [1, 8, 32], strides = [1, 1, 1]} : vector<1x8x128xbf16> to vector<1x8x32xbf16>
    "tpu.trace_start"() <{level = 10 : i32, message = "bqd,bkd->bqk"}> : () -> ()
    %cst_28 = arith.constant dense<0.000000e+00> : vector<1x8x8xf32>
    %78 = tpu.matmul %75, %76, %cst_28 {dimension_numbers = #tpu.dot_dimension_numbers<[2], [2], [1], [1], [0, 0, 0, 1, 1, 1], [0], [0]>} : vector<1x8x32xbf16>, vector<1x8x32xbf16>, vector<1x8x8xf32> -> vector<1x8x8xf32>
    "tpu.trace_stop"() : () -> ()
    %cst_29 = arith.constant dense<0xFF800000> : vector<1x8xf32>
    %79 = vector.multi_reduction <maximumf>, %78, %cst_29 [2] : vector<1x8x8xf32> to vector<1x8xf32>
    %80 = vector.shape_cast %79 : vector<1x8xf32> to vector<1x8x1xf32>
    %81 = vector.broadcast %80 : vector<1x8x1xf32> to vector<1x8x8xf32>
    %82 = arith.subf %78, %81 : vector<1x8x8xf32>
    %83 = math.exp %82 : vector<1x8x8xf32>
    %cst_30 = arith.constant dense<0.000000e+00> : vector<1x8xf32>
    %84 = vector.multi_reduction <add>, %83, %cst_30 [2] : vector<1x8x8xf32> to vector<1x8xf32>
    %85 = vector.shape_cast %84 : vector<1x8xf32> to vector<1x8x1xf32>
    %86 = tpu.reciprocal %85 {approx = true} : vector<1x8x1xf32> -> vector<1x8x1xf32>
    %87 = vector.broadcast %86 : vector<1x8x1xf32> to vector<1x8x8xf32>
    %88 = arith.mulf %83, %87 : vector<1x8x8xf32>
    %89 = arith.truncf %88 : vector<1x8x8xf32> to vector<1x8x8xbf16>
    "tpu.trace_start"() <{level = 10 : i32, message = "bqk,bkd->bqd"}> : () -> ()
    %cst_31 = arith.constant dense<0.000000e+00> : vector<1x8x32xf32>
    %90 = tpu.matmul %89, %77, %cst_31 {dimension_numbers = #tpu.dot_dimension_numbers<[2], [1], [1], [2], [0, 0, 0, 1, 1, 2], [0], [0]>} : vector<1x8x8xbf16>, vector<1x8x32xbf16>, vector<1x8x32xf32> -> vector<1x8x32xf32>
    "tpu.trace_stop"() : () -> ()
    %c0_32 = arith.constant 0 : index
    %c0_33 = arith.constant 0 : index
    %c64 = arith.constant 64 : index
    %91 = vector.load %arg15[%c0_32, %c0_33, %c64] : memref<1x8x128xf32, #tpu.memory_space<vmem>>, vector<1x8x32xf32>
    tpu.vector_store %arg15[%c0_32, %c0_33, %c64], %90 {strides = array<i32>} : memref<1x8x128xf32, #tpu.memory_space<vmem>>, vector<1x8x32xf32>,
    %92 = vector.extract_strided_slice %34 {offsets = [0, 0, 96], sizes = [1, 8, 32], strides = [1, 1, 1]} : vector<1x8x128xbf16> to vector<1x8x32xbf16>
    %93 = vector.extract_strided_slice %37 {offsets = [0, 0, 96], sizes = [1, 8, 32], strides = [1, 1, 1]} : vector<1x8x128xbf16> to vector<1x8x32xbf16>
    %94 = vector.extract_strided_slice %40 {offsets = [0, 0, 96], sizes = [1, 8, 32], strides = [1, 1, 1]} : vector<1x8x128xbf16> to vector<1x8x32xbf16>
    "tpu.trace_start"() <{level = 10 : i32, message = "bqd,bkd->bqk"}> : () -> ()
    %cst_34 = arith.constant dense<0.000000e+00> : vector<1x8x8xf32>
    %95 = tpu.matmul %92, %93, %cst_34 {dimension_numbers = #tpu.dot_dimension_numbers<[2], [2], [1], [1], [0, 0, 0, 1, 1, 1], [0], [0]>} : vector<1x8x32xbf16>, vector<1x8x32xbf16>, vector<1x8x8xf32> -> vector<1x8x8xf32>
    "tpu.trace_stop"() : () -> ()
    %cst_35 = arith.constant dense<0xFF800000> : vector<1x8xf32>
    %96 = vector.multi_reduction <maximumf>, %95, %cst_35 [2] : vector<1x8x8xf32> to vector<1x8xf32>
    %97 = vector.shape_cast %96 : vector<1x8xf32> to vector<1x8x1xf32>
    %98 = vector.broadcast %97 : vector<1x8x1xf32> to vector<1x8x8xf32>
    %99 = arith.subf %95, %98 : vector<1x8x8xf32>
    %100 = math.exp %99 : vector<1x8x8xf32>
    %cst_36 = arith.constant dense<0.000000e+00> : vector<1x8xf32>
    %101 = vector.multi_reduction <add>, %100, %cst_36 [2] : vector<1x8x8xf32> to vector<1x8xf32>
    %102 = vector.shape_cast %101 : vector<1x8xf32> to vector<1x8x1xf32>
    %103 = tpu.reciprocal %102 {approx = true} : vector<1x8x1xf32> -> vector<1x8x1xf32>
    %104 = vector.broadcast %103 : vector<1x8x1xf32> to vector<1x8x8xf32>
    %105 = arith.mulf %100, %104 : vector<1x8x8xf32>
    %106 = arith.truncf %105 : vector<1x8x8xf32> to vector<1x8x8xbf16>
    "tpu.trace_start"() <{level = 10 : i32, message = "bqk,bkd->bqd"}> : () -> ()
    %cst_37 = arith.constant dense<0.000000e+00> : vector<1x8x32xf32>
    %107 = tpu.matmul %106, %94, %cst_37 {dimension_numbers = #tpu.dot_dimension_numbers<[2], [1], [1], [2], [0, 0, 0, 1, 1, 2], [0], [0]>} : vector<1x8x8xbf16>, vector<1x8x32xbf16>, vector<1x8x32xf32> -> vector<1x8x32xf32>
    "tpu.trace_stop"() : () -> ()
    %c0_38 = arith.constant 0 : index
    %c0_39 = arith.constant 0 : index
    %c96 = arith.constant 96 : index
    %108 = vector.load %arg15[%c0_38, %c0_39, %c96] : memref<1x8x128xf32, #tpu.memory_space<vmem>>, vector<1x8x32xf32>
    tpu.vector_store %arg15[%c0_38, %c0_39, %c96], %107 {strides = array<i32>} : memref<1x8x128xf32, #tpu.memory_space<vmem>>, vector<1x8x32xf32>,
    %c0_40 = arith.constant 0 : index
    %c0_41 = arith.constant 0 : index
    %c0_42 = arith.constant 0 : index
    %109 = vector.load %arg15[%c0_40, %c0_41, %c0_42] : memref<1x8x128xf32, #tpu.memory_space<vmem>>, vector<1x8x128xf32>
    %110 = vector.shape_cast %109 : vector<1x8x128xf32> to vector<8x128xf32>
    %111 = arith.truncf %110 : vector<8x128xf32> to vector<8x128xbf16>
    %c0_43 = arith.constant 0 : index
    %c0_44 = arith.constant 0 : index
    %112 = vector.load %arg6[%c0_43, %c0_44] : memref<128x128xbf16, #tpu.memory_space<vmem>>, vector<128x128xbf16>
    %cst_45 = arith.constant dense<0.000000e+00> : vector<8x128xf32>
    %113 = tpu.matmul %111, %112, %cst_45 {dimension_numbers = #tpu.dot_dimension_numbers<[1], [0], [0], [1], [0, 0, 1, 1], [], []>} : vector<8x128xbf16>, vector<128x128xbf16>, vector<8x128xf32> -> vector<8x128xf32>
    %c0_46 = arith.constant 0 : index
    %c0_47 = arith.constant 0 : index
    %114 = vector.load %arg7[%c0_46, %c0_47] : memref<1x128xf32, #tpu.memory_space<vmem>>, vector<1x128xf32>
    %115 = vector.broadcast %114 : vector<1x128xf32> to vector<8x128xf32>
    %116 = arith.addf %113, %115 : vector<8x128xf32>
    %117 = arith.addf %1, %116 : vector<8x128xf32>
    %c0_48 = arith.constant 0 : index
    %c0_49 = arith.constant 0 : index
    %118 = vector.load %arg8[%c0_48, %c0_49] : memref<1x128xf32, #tpu.memory_space<vmem>>, vector<1x128xf32>
    %c0_50 = arith.constant 0 : index
    %c0_51 = arith.constant 0 : index
    %119 = vector.load %arg9[%c0_50, %c0_51] : memref<1x128xf32, #tpu.memory_space<vmem>>, vector<1x128xf32>
    %cst_52 = arith.constant dense<0.000000e+00> : vector<8xf32>
    %120 = vector.multi_reduction <add>, %117, %cst_52 [1] : vector<8x128xf32> to vector<8xf32>
    %121 = vector.shape_cast %120 : vector<8xf32> to vector<8x1xf32>
    %122 = arith.mulf %117, %117 : vector<8x128xf32>
    %cst_53 = arith.constant dense<0.000000e+00> : vector<8xf32>
    %123 = vector.multi_reduction <add>, %122, %cst_53 [1] : vector<8x128xf32> to vector<8xf32>
    %124 = vector.shape_cast %123 : vector<8xf32> to vector<8x1xf32>
    %cst_54 = arith.constant 7.812500e-03 : f32
    %125 = vector.broadcast %cst_54 : f32 to vector<8x1xf32>
    %126 = arith.mulf %121, %125 : vector<8x1xf32>
    %cst_55 = arith.constant 7.812500e-03 : f32
    %127 = vector.broadcast %cst_55 : f32 to vector<8x1xf32>
    %128 = arith.mulf %124, %127 : vector<8x1xf32>
    %129 = arith.mulf %126, %126 : vector<8x1xf32>
    %130 = arith.subf %128, %129 : vector<8x1xf32>
    %131 = vector.broadcast %126 : vector<8x1xf32> to vector<8x128xf32>
    %132 = arith.subf %117, %131 : vector<8x128xf32>
    %cst_56 = arith.constant 9.99999974E-6 : f32
    %133 = vector.broadcast %cst_56 : f32 to vector<8x1xf32>
    %134 = arith.addf %130, %133 : vector<8x1xf32>
    %135 = math.rsqrt %134 : vector<8x1xf32>
    %136 = vector.broadcast %135 : vector<8x1xf32> to vector<8x128xf32>
    %137 = arith.mulf %132, %136 : vector<8x128xf32>
    %138 = vector.broadcast %118 : vector<1x128xf32> to vector<8x128xf32>
    %139 = arith.mulf %137, %138 : vector<8x128xf32>
    %140 = vector.broadcast %119 : vector<1x128xf32> to vector<8x128xf32>
    %141 = arith.addf %139, %140 : vector<8x128xf32>
    %142 = arith.truncf %141 : vector<8x128xf32> to vector<8x128xbf16>
    %c0_57 = arith.constant 0 : index
    %c0_58 = arith.constant 0 : index
    %143 = vector.load %arg10[%c0_57, %c0_58] : memref<128x512xbf16, #tpu.memory_space<vmem>>, vector<128x512xbf16>
    %cst_59 = arith.constant dense<0.000000e+00> : vector<8x512xf32>
    %144 = tpu.matmul %142, %143, %cst_59 {dimension_numbers = #tpu.dot_dimension_numbers<[1], [0], [0], [1], [0, 0, 1, 1], [], []>} : vector<8x128xbf16>, vector<128x512xbf16>, vector<8x512xf32> -> vector<8x512xf32>
    %c0_60 = arith.constant 0 : index
    %c0_61 = arith.constant 0 : index
    %145 = vector.load %arg11[%c0_60, %c0_61] : memref<1x512xf32, #tpu.memory_space<vmem>>, vector<1x512xf32>
    %146 = vector.broadcast %145 : vector<1x512xf32> to vector<8x512xf32>
    %147 = arith.addf %144, %146 : vector<8x512xf32>
    %cst_62 = arith.constant 0.000000e+00 : f32
    %148 = vector.broadcast %cst_62 : f32 to vector<8x512xf32>
    %149 = arith.maximumf %147, %148 : vector<8x512xf32>
    %150 = arith.truncf %149 : vector<8x512xf32> to vector<8x512xbf16>
    %c0_63 = arith.constant 0 : index
    %c0_64 = arith.constant 0 : index
    %151 = vector.load %arg12[%c0_63, %c0_64] : memref<512x128xbf16, #tpu.memory_space<vmem>>, vector<512x128xbf16>
    %cst_65 = arith.constant dense<0.000000e+00> : vector<8x128xf32>
    %152 = tpu.matmul %150, %151, %cst_65 {dimension_numbers = #tpu.dot_dimension_numbers<[1], [0], [0], [1], [0, 0, 1, 1], [], []>} : vector<8x512xbf16>, vector<512x128xbf16>, vector<8x128xf32> -> vector<8x128xf32>
    %c0_66 = arith.constant 0 : index
    %c0_67 = arith.constant 0 : index
    %153 = vector.load %arg13[%c0_66, %c0_67] : memref<1x128xf32, #tpu.memory_space<vmem>>, vector<1x128xf32>
    %154 = vector.broadcast %153 : vector<1x128xf32> to vector<8x128xf32>
    %155 = arith.addf %152, %154 : vector<8x128xf32>
    %156 = arith.addf %117, %155 : vector<8x128xf32>
    %157 = vector.shape_cast %156 : vector<8x128xf32> to vector<1x8x128xf32>
    %c0_68 = arith.constant 0 : index
    %c0_69 = arith.constant 0 : index
    %c0_70 = arith.constant 0 : index
    %158 = vector.load %arg14[%c0_68, %c0_69, %c0_70] : memref<1x8x128xf32, #tpu.memory_space<vmem>>, vector<1x8x128xf32>
    tpu.vector_store %arg14[%c0_68, %c0_69, %c0_70], %157 {strides = array<i32>} : memref<1x8x128xf32, #tpu.memory_space<vmem>>, vector<1x8x128xf32>,
    return
  }
  func.func @transform_0(%arg0: i32) -> (i32, i32, i32) {
    %c0_i32 = arith.constant 0 : i32
    %c0_i32_0 = arith.constant 0 : i32
    %c0_i32_1 = arith.constant 0 : i32
    return %arg0, %c0_i32, %c0_i32_0 : i32, i32, i32
  }
  func.func @transform_1(%arg0: i32) -> (i32, i32) {
    %c0_i32 = arith.constant 0 : i32
    %c0_i32_0 = arith.constant 0 : i32
    %c0_i32_1 = arith.constant 0 : i32
    return %c0_i32, %c0_i32_0 : i32, i32
  }
  func.func @transform_2(%arg0: i32) -> (i32, i32) {
    %c0_i32 = arith.constant 0 : i32
    %c0_i32_0 = arith.constant 0 : i32
    %c0_i32_1 = arith.constant 0 : i32
    return %c0_i32, %c0_i32_0 : i32, i32
  }
  func.func @transform_3(%arg0: i32) -> (i32, i32) {
    %c0_i32 = arith.constant 0 : i32
    %c0_i32_0 = arith.constant 0 : i32
    %c0_i32_1 = arith.constant 0 : i32
    return %c0_i32, %c0_i32_0 : i32, i32
  }
  func.func @transform_4(%arg0: i32) -> (i32, i32) {
    %c0_i32 = arith.constant 0 : i32
    %c0_i32_0 = arith.constant 0 : i32
    %c0_i32_1 = arith.constant 0 : i32
    return %c0_i32, %c0_i32_0 : i32, i32
  }
  func.func @transform_5(%arg0: i32) -> (i32, i32) {
    %c0_i32 = arith.constant 0 : i32
    %c0_i32_0 = arith.constant 0 : i32
    %c0_i32_1 = arith.constant 0 : i32
    return %c0_i32, %c0_i32_0 : i32, i32
  }
  func.func @transform_6(%arg0: i32) -> (i32, i32) {
    %c0_i32 = arith.constant 0 : i32
    %c0_i32_0 = arith.constant 0 : i32
    %c0_i32_1 = arith.constant 0 : i32
    return %c0_i32, %c0_i32_0 : i32, i32
  }
  func.func @transform_7(%arg0: i32) -> (i32, i32) {
    %c0_i32 = arith.constant 0 : i32
    %c0_i32_0 = arith.constant 0 : i32
    %c0_i32_1 = arith.constant 0 : i32
    return %c0_i32, %c0_i32_0 : i32, i32
  }
  func.func @transform_8(%arg0: i32) -> (i32, i32) {
    %c0_i32 = arith.constant 0 : i32
    %c0_i32_0 = arith.constant 0 : i32
    %c0_i32_1 = arith.constant 0 : i32
    return %c0_i32, %c0_i32_0 : i32, i32
  }
  func.func @transform_9(%arg0: i32) -> (i32, i32) {
    %c0_i32 = arith.constant 0 : i32
    %c0_i32_0 = arith.constant 0 : i32
    %c0_i32_1 = arith.constant 0 : i32
    return %c0_i32, %c0_i32_0 : i32, i32
  }
  func.func @transform_10(%arg0: i32) -> (i32, i32) {
    %c0_i32 = arith.constant 0 : i32
    %c0_i32_0 = arith.constant 0 : i32
    %c0_i32_1 = arith.constant 0 : i32
    return %c0_i32, %c0_i32_0 : i32, i32
  }
  func.func @transform_11(%arg0: i32) -> (i32, i32) {
    %c0_i32 = arith.constant 0 : i32
    %c0_i32_0 = arith.constant 0 : i32
    %c0_i32_1 = arith.constant 0 : i32
    return %c0_i32, %c0_i32_0 : i32, i32
  }
  func.func @transform_12(%arg0: i32) -> (i32, i32) {
    %c0_i32 = arith.constant 0 : i32
    %c0_i32_0 = arith.constant 0 : i32
    %c0_i32_1 = arith.constant 0 : i32
    return %c0_i32, %c0_i32_0 : i32, i32
  }
  func.func @transform_13(%arg0: i32) -> (i32, i32, i32) {
    %c0_i32 = arith.constant 0 : i32
    %c0_i32_0 = arith.constant 0 : i32
    %c0_i32_1 = arith.constant 0 : i32
    return %arg0, %c0_i32, %c0_i32_0 : i32, i32, i32
  }
}

</mosaic_0001>

<llo_original>
// kernel: transformer_block.1
$region0: #{transformer_block.1}
  #allocation0 [shape = 'u32[]', space=smem, size = 0x4, offset = 0x4, fixed_abs, tag = 'smem constant byte address 0x4 - core index']
  #allocation1 [shape = 'u32[144,128]{1,0:T(1,128)}', space=vmem, size = 0x12000, scoped, tag = 'internal scratch']
  #allocation2 [shape = 'f32[1,8,128]{2,1,0:T(8,128)}', space=vmem, size = 0x1000, scoped, tag = 'scratch operand']
  %s0 = inlined_call_operand.hbm [shape: f32[2,8,128], index: 0, kind: input, shape index: {}]
  %s1 = inlined_call_operand.hbm [shape: f32[1,128], index: 1, kind: input, shape index: {}]
  %s2 = inlined_call_operand.hbm [shape: f32[1,128], index: 2, kind: input, shape index: {}]
  %s3 = inlined_call_operand.hbm [shape: bf16[128,384], index: 3, kind: input, shape index: {}]
  %s4 = inlined_call_operand.vmem [shape: f32[1,384], index: 4, kind: input, shape index: {}]
  %s5 = inlined_call_operand.hbm [shape: bf16[128,128], index: 5, kind: input, shape index: {}]
  %s6 = inlined_call_operand.vmem [shape: f32[1,128], index: 6, kind: input, shape index: {}]
  %s7 = inlined_call_operand.vmem [shape: f32[1,128], index: 7, kind: input, shape index: {}]
  %s8 = inlined_call_operand.vmem [shape: f32[1,128], index: 8, kind: input, shape index: {}]
  %s9 = inlined_call_operand.hbm [shape: bf16[128,512], index: 9, kind: input, shape index: {}]
  %s10 = inlined_call_operand.vmem [shape: f32[1,512], index: 10, kind: input, shape index: {}]
  %s11 = inlined_call_operand.hbm [shape: bf16[512,128], index: 11, kind: input, shape index: {}]
  %s12 = inlined_call_operand.vmem [shape: f32[1,128], index: 12, kind: input, shape index: {}]
  %s13 = inlined_call_operand.hbm [shape: f32[2,8,128], index: 13, kind: output, shape index: {}]
  %s14 = sld [smem:[#allocation0]]
  $region113: #{transformer_block.1} parent=0
    _
  %s16 = ssub.s32 1, %s14
  %s17 = scalar_select 0, %s16, %s14
  $region1: #{transformer_block.1} parent=0
    #allocation3 [shape = 'u8[8192]{0}', space=vmem, size = 0x2000, scoped, tag = 'input window, operand 0']
    #allocation4 [shape = 's32[2]{0}', space=sflag, size = 0x8, scoped, tag = 'scoped memory for transformer_block.1']
    #allocation5 [shape = 's32[2]{0}', space=sflag, size = 0x8, scoped, tag = 'scoped memory for transformer_block.1']
    #allocation6 [shape = 'u8[512]{0}', space=vmem, size = 0x400, scoped, tag = 'input window, operand 1, single buffered']
    #allocation7 [shape = 's32[1]{0}', space=sflag, size = 0x4, scoped, tag = 'scoped memory for transformer_block.1']
    #allocation8 [shape = 'u8[512]{0}', space=vmem, size = 0x400, scoped, tag = 'input window, operand 2, single buffered']
    #allocation9 [shape = 'u8[98304]{0}', space=vmem, size = 0x18000, scoped, tag = 'input window, operand 3, single buffered']
    #allocation10 [shape = 's32[1]{0}', space=sflag, size = 0x4, scoped, tag = 'scoped memory for transformer_block.1']
    #allocation11 [shape = 'u8[32768]{0}', space=vmem, size = 0x8000, scoped, tag = 'input window, operand 5, single buffered']
    #allocation12 [shape = 'u8[131072]{0}', space=vmem, size = 0x20000, scoped, tag = 'input window, operand 9, single buffered']
    #allocation13 [shape = 's32[1]{0}', space=sflag, size = 0x4, scoped, tag = 'scoped memory for transformer_block.1']
    #allocation14 [shape = 'u8[131072]{0}', space=vmem, size = 0x20000, scoped, tag = 'input window, operand 11, single buffered']
    #allocation15 [shape = 'u8[8192]{0}', space=vmem, size = 0x2000, scoped, tag = 'output window, operand 0']
    %18 = vsyncpa [#allocation4], 0
    %s19 = scalar_lea.sflag [#allocation4], 1
    %20 = vsyncpa %s19, 0
    %21 = vsyncpa [#allocation7], 0
    %22 = vsyncpa [#allocation10], 0
    %23 = vsyncpa [#allocation13], 0
    %24 = vsyncpa [#allocation5], 0
    %s25 = scalar_lea.sflag [#allocation5], 1
    %26 = vsyncpa %s25, 0
    loop: start=0, step=1, limit=4
    $region2: #{transformer_block.1} parent=1 // loop_pre_header
      _
    $region3: #{transformer_block.1} parent=1 // loop_header
      %s28 = sphi 0, %s32
      %p29 = scmp.ge.s32.totalorder %s28, 4
      %s38 = sphi 0, %s40
      %s41 = sphi 0, %s38
      %s42 = sphi 0, %s41
      %s58 = sphi 0, %s42
      %s62 = sphi 0, %s62
      %s64 = sphi 0, %s62
      %s65 = sphi 0, %s64
      %s79 = sphi 0, %s65
      %s83 = sphi 0, %s83
      %s85 = sphi 0, %s83
      %s86 = sphi 0, %s85
      %s100 = sphi 0, %s86
      %s104 = sphi 0, %s104
      %s106 = sphi 0, %s104
      %s107 = sphi 0, %s106
      %s121 = sphi 0, %s107
      %s125 = sphi 0, %s125
      %s127 = sphi 0, %s125
      %s128 = sphi 0, %s127
      %s142 = sphi 0, %s128
      %s146 = sphi 0, %s146
      %s148 = sphi 0, %s146
      %s149 = sphi 0, %s148
      %s163 = sphi 0, %s149
      %s167 = sphi 0, %s167
      %s169 = sphi 0, %s167
      %s170 = sphi 0, %s169
      %s184 = sphi 0, %s170
      %s188 = sphi 0, %s188
      %s190 = sphi 0, %s188
      %s191 = sphi 0, %s190
      %s205 = sphi 0, %s191
      %s209 = sphi 0, %s209
      %s211 = sphi 0, %s209
      %s212 = sphi 0, %s211
      %s226 = sphi 0, %s212
      %s230 = sphi 0, %s230
      %s232 = sphi 0, %s230
      %s233 = sphi 0, %s232
      %s247 = sphi 0, %s233
      %s251 = sphi 0, %s251
      %s253 = sphi 0, %s251
      %s254 = sphi 0, %s253
      %s268 = sphi 0, %s254
      %s272 = sphi 0, %s272
      %s274 = sphi 0, %s272
      %s275 = sphi 0, %s274
      %s289 = sphi 0, %s275
      %s293 = sphi 0, %s293
      %s295 = sphi 0, %s293
      %s296 = sphi 0, %s295
      %s310 = sphi 0, %s296
      %s316 = sphi 0, %s318
      %s319 = sphi 0, %s316
      %s320 = sphi 0, %s319
      %s336 = sphi 0, %s320
    $region4: #{transformer_block.1} parent=1 // loop_header_branch
      %31 = sbr.rel (%p29) target = $region8
    $region5: #{transformer_block.1} parent=1 // loop_body
      %s33 = ssub.s32 %s28, 1
      %s34 = ssub.s32 %s28, 2
      %s35 = sadd.s32 %s28, 1
      %s36 = ssub.s32 %s28, %s35
      %p37 = scmp.eq.s32.totalorder %s36, 0
      %s39 = sadd.s32 %s38, 1
      %s40 = scalar_select %p37, %s38, %s39
      %p43 = pneg %p37
      %p44 = scmp.eq.s32.totalorder %s28, 1
      %p45 = por %p43, %p44
      %p46 = scmp.ne.s32.totalorder %s38, %s41
      %p47 = scmp.eq.s32.totalorder %s28, 0
      %p48 = por %p46, %p47
      %p49 = scmp.ne.s32.totalorder %s38, %s41
      %p50 = scmp.eq.s32.totalorder %s33, 1
      %p51 = por %p49, %p50
      %p52 = scmp.ne.s32.totalorder %s41, %s42
      %p53 = scmp.eq.s32.totalorder %s33, 0
      %p54 = por %p52, %p53
      %p55 = scmp.ne.s32.totalorder %s41, %s42
      %p56 = scmp.eq.s32.totalorder %s34, 1
      %p57 = por %p55, %p56
      %p59 = scmp.ne.s32.totalorder %s42, %s58
      %p60 = scmp.eq.s32.totalorder %s34, 0
      %p61 = por %p59, %p60
      %s63 = sadd.s32 %s62, 1
      %p66 = scmp.eq.s32.totalorder %s28, 1
      %p67 = scmp.ne.s32.totalorder %s62, %s64
      %p68 = scmp.eq.s32.totalorder %s28, 0
      %p69 = por %p67, %p68
      %p70 = scmp.ne.s32.totalorder %s62, %s64
      %p71 = scmp.eq.s32.totalorder %s33, 1
      %p72 = por %p70, %p71
      %p73 = scmp.ne.s32.totalorder %s64, %s65
      %p74 = scmp.eq.s32.totalorder %s33, 0
      %p75 = por %p73, %p74
      %p76 = scmp.ne.s32.totalorder %s64, %s65
      %p77 = scmp.eq.s32.totalorder %s34, 1
      %p78 = por %p76, %p77
      %p80 = scmp.ne.s32.totalorder %s65, %s79
      %p81 = scmp.eq.s32.totalorder %s34, 0
      %p82 = por %p80, %p81
      %s84 = sadd.s32 %s83, 1
      %p87 = scmp.eq.s32.totalorder %s28, 1
      %p88 = scmp.ne.s32.totalorder %s83, %s85
      %p89 = scmp.eq.s32.totalorder %s28, 0
      %p90 = por %p88, %p89
      %p91 = scmp.ne.s32.totalorder %s83, %s85
      %p92 = scmp.eq.s32.totalorder %s33, 1
      %p93 = por %p91, %p92
      %p94 = scmp.ne.s32.totalorder %s85, %s86
      %p95 = scmp.eq.s32.totalorder %s33, 0
      %p96 = por %p94, %p95
      %p97 = scmp.ne.s32.totalorder %s85, %s86
      %p98 = scmp.eq.s32.totalorder %s34, 1
      %p99 = por %p97, %p98
      %p101 = scmp.ne.s32.totalorder %s86, %s100
      %p102 = scmp.eq.s32.totalorder %s34, 0
      %p103 = por %p101, %p102
      %s105 = sadd.s32 %s104, 1
      %p108 = scmp.eq.s32.totalorder %s28, 1
      %p109 = scmp.ne.s32.totalorder %s104, %s106
      %p110 = scmp.eq.s32.totalorder %s28, 0
      %p111 = por %p109, %p110
      %p112 = scmp.ne.s32.totalorder %s104, %s106
      %p113 = scmp.eq.s32.totalorder %s33, 1
      %p114 = por %p112, %p113
      %p115 = scmp.ne.s32.totalorder %s106, %s107
      %p116 = scmp.eq.s32.totalorder %s33, 0
      %p117 = por %p115, %p116
      %p118 = scmp.ne.s32.totalorder %s106, %s107
      %p119 = scmp.eq.s32.totalorder %s34, 1
      %p120 = por %p118, %p119
      %p122 = scmp.ne.s32.totalorder %s107, %s121
      %p123 = scmp.eq.s32.totalorder %s34, 0
      %p124 = por %p122, %p123
      %s126 = sadd.s32 %s125, 1
      %p129 = scmp.eq.s32.totalorder %s28, 1
      %p130 = scmp.ne.s32.totalorder %s125, %s127
      %p131 = scmp.eq.s32.totalorder %s28, 0
      %p132 = por %p130, %p131
      %p133 = scmp.ne.s32.totalorder %s125, %s127
      %p134 = scmp.eq.s32.totalorder %s33, 1
      %p135 = por %p133, %p134
      %p136 = scmp.ne.s32.totalorder %s127, %s128
      %p137 = scmp.eq.s32.totalorder %s33, 0
      %p138 = por %p136, %p137
      %p139 = scmp.ne.s32.totalorder %s127, %s128
      %p140 = scmp.eq.s32.totalorder %s34, 1
      %p141 = por %p139, %p140
      %p143 = scmp.ne.s32.totalorder %s128, %s142
      %p144 = scmp.eq.s32.totalorder %s34, 0
      %p145 = por %p143, %p144
      %s147 = sadd.s32 %s146, 1
      %p150 = scmp.eq.s32.totalorder %s28, 1
      %p151 = scmp.ne.s32.totalorder %s146, %s148
      %p152 = scmp.eq.s32.totalorder %s28, 0
      %p153 = por %p151, %p152
      %p154 = scmp.ne.s32.totalorder %s146, %s148
      %p155 = scmp.eq.s32.totalorder %s33, 1
      %p156 = por %p154, %p155
      %p157 = scmp.ne.s32.totalorder %s148, %s149
      %p158 = scmp.eq.s32.totalorder %s33, 0
      %p159 = por %p157, %p158
      %p160 = scmp.ne.s32.totalorder %s148, %s149
      %p161 = scmp.eq.s32.totalorder %s34, 1
      %p162 = por %p160, %p161
      %p164 = scmp.ne.s32.totalorder %s149, %s163
      %p165 = scmp.eq.s32.totalorder %s34, 0
      %p166 = por %p164, %p165
      %s168 = sadd.s32 %s167, 1
      %p171 = scmp.eq.s32.totalorder %s28, 1
      %p172 = scmp.ne.s32.totalorder %s167, %s169
      %p173 = scmp.eq.s32.totalorder %s28, 0
      %p174 = por %p172, %p173
      %p175 = scmp.ne.s32.totalorder %s167, %s169
      %p176 = scmp.eq.s32.totalorder %s33, 1
      %p177 = por %p175, %p176
      %p178 = scmp.ne.s32.totalorder %s169, %s170
      %p179 = scmp.eq.s32.totalorder %s33, 0
      %p180 = por %p178, %p179
      %p181 = scmp.ne.s32.totalorder %s169, %s170
      %p182 = scmp.eq.s32.totalorder %s34, 1
      %p183 = por %p181, %p182
      %p185 = scmp.ne.s32.totalorder %s170, %s184
      %p186 = scmp.eq.s32.totalorder %s34, 0
      %p187 = por %p185, %p186
      %s189 = sadd.s32 %s188, 1
      %p192 = scmp.eq.s32.totalorder %s28, 1
      %p193 = scmp.ne.s32.totalorder %s188, %s190
      %p194 = scmp.eq.s32.totalorder %s28, 0
      %p195 = por %p193, %p194
      %p196 = scmp.ne.s32.totalorder %s188, %s190
      %p197 = scmp.eq.s32.totalorder %s33, 1
      %p198 = por %p196, %p197
      %p199 = scmp.ne.s32.totalorder %s190, %s191
      %p200 = scmp.eq.s32.totalorder %s33, 0
      %p201 = por %p199, %p200
      %p202 = scmp.ne.s32.totalorder %s190, %s191
      %p203 = scmp.eq.s32.totalorder %s34, 1
      %p204 = por %p202, %p203
      %p206 = scmp.ne.s32.totalorder %s191, %s205
      %p207 = scmp.eq.s32.totalorder %s34, 0
      %p208 = por %p206, %p207
      %s210 = sadd.s32 %s209, 1
      %p213 = scmp.eq.s32.totalorder %s28, 1
      %p214 = scmp.ne.s32.totalorder %s209, %s211
      %p215 = scmp.eq.s32.totalorder %s28, 0
      %p216 = por %p214, %p215
      %p217 = scmp.ne.s32.totalorder %s209, %s211
      %p218 = scmp.eq.s32.totalorder %s33, 1
      %p219 = por %p217, %p218
      %p220 = scmp.ne.s32.totalorder %s211, %s212
      %p221 = scmp.eq.s32.totalorder %s33, 0
      %p222 = por %p220, %p221
      %p223 = scmp.ne.s32.totalorder %s211, %s212
      %p224 = scmp.eq.s32.totalorder %s34, 1
      %p225 = por %p223, %p224
      %p227 = scmp.ne.s32.totalorder %s212, %s226
      %p228 = scmp.eq.s32.totalorder %s34, 0
      %p229 = por %p227, %p228
      %s231 = sadd.s32 %s230, 1
      %p234 = scmp.eq.s32.totalorder %s28, 1
      %p235 = scmp.ne.s32.totalorder %s230, %s232
      %p236 = scmp.eq.s32.totalorder %s28, 0
      %p237 = por %p235, %p236
      %p238 = scmp.ne.s32.totalorder %s230, %s232
      %p239 = scmp.eq.s32.totalorder %s33, 1
      %p240 = por %p238, %p239
      %p241 = scmp.ne.s32.totalorder %s232, %s233
      %p242 = scmp.eq.s32.totalorder %s33, 0
      %p243 = por %p241, %p242
      %p244 = scmp.ne.s32.totalorder %s232, %s233
      %p245 = scmp.eq.s32.totalorder %s34, 1
      %p246 = por %p244, %p245
      %p248 = scmp.ne.s32.totalorder %s233, %s247
      %p249 = scmp.eq.s32.totalorder %s34, 0
      %p250 = por %p248, %p249
      %s252 = sadd.s32 %s251, 1
      %p255 = scmp.eq.s32.totalorder %s28, 1
      %p256 = scmp.ne.s32.totalorder %s251, %s253
      %p257 = scmp.eq.s32.totalorder %s28, 0
      %p258 = por %p256, %p257
      %p259 = scmp.ne.s32.totalorder %s251, %s253
      %p260 = scmp.eq.s32.totalorder %s33, 1
      %p261 = por %p259, %p260
      %p262 = scmp.ne.s32.totalorder %s253, %s254
      %p263 = scmp.eq.s32.totalorder %s33, 0
      %p264 = por %p262, %p263
      %p265 = scmp.ne.s32.totalorder %s253, %s254
      %p266 = scmp.eq.s32.totalorder %s34, 1
      %p267 = por %p265, %p266
      %p269 = scmp.ne.s32.totalorder %s254, %s268
      %p270 = scmp.eq.s32.totalorder %s34, 0
      %p271 = por %p269, %p270
      %s273 = sadd.s32 %s272, 1
      %p276 = scmp.eq.s32.totalorder %s28, 1
      %p277 = scmp.ne.s32.totalorder %s272, %s274
      %p278 = scmp.eq.s32.totalorder %s28, 0
      %p279 = por %p277, %p278
      %p280 = scmp.ne.s32.totalorder %s272, %s274
      %p281 = scmp.eq.s32.totalorder %s33, 1
      %p282 = por %p280, %p281
      %p283 = scmp.ne.s32.totalorder %s274, %s275
      %p284 = scmp.eq.s32.totalorder %s33, 0
      %p285 = por %p283, %p284
      %p286 = scmp.ne.s32.totalorder %s274, %s275
      %p287 = scmp.eq.s32.totalorder %s34, 1
      %p288 = por %p286, %p287
      %p290 = scmp.ne.s32.totalorder %s275, %s289
      %p291 = scmp.eq.s32.totalorder %s34, 0
      %p292 = por %p290, %p291
      %s294 = sadd.s32 %s293, 1
      %p297 = scmp.eq.s32.totalorder %s28, 1
      %p298 = scmp.ne.s32.totalorder %s293, %s295
      %p299 = scmp.eq.s32.totalorder %s28, 0
      %p300 = por %p298, %p299
      %p301 = scmp.ne.s32.totalorder %s293, %s295
      %p302 = scmp.eq.s32.totalorder %s33, 1
      %p303 = por %p301, %p302
      %p304 = scmp.ne.s32.totalorder %s295, %s296
      %p305 = scmp.eq.s32.totalorder %s33, 0
      %p306 = por %p304, %p305
      %p307 = scmp.ne.s32.totalorder %s295, %s296
      %p308 = scmp.eq.s32.totalorder %s34, 1
      %p309 = por %p307, %p308
      %p311 = scmp.ne.s32.totalorder %s296, %s310
      %p312 = scmp.eq.s32.totalorder %s34, 0
      %p313 = por %p311, %p312
      %s314 = ssub.s32 %s28, %s35
      %p315 = scmp.eq.s32.totalorder %s314, 0
      %s317 = sadd.s32 %s316, 1
      %s318 = scalar_select %p315, %s316, %s317
      %p321 = pneg %p315
      %p322 = scmp.eq.s32.totalorder %s28, 1
      %p323 = por %p321, %p322
      %p324 = scmp.ne.s32.totalorder %s316, %s319
      %p325 = scmp.eq.s32.totalorder %s28, 0
      %p326 = por %p324, %p325
      %p327 = scmp.ne.s32.totalorder %s316, %s319
      %p328 = scmp.eq.s32.totalorder %s33, 1
      %p329 = por %p327, %p328
      %p330 = scmp.ne.s32.totalorder %s319, %s320
      %p331 = scmp.eq.s32.totalorder %s33, 0
      %p332 = por %p330, %p331
      %p333 = scmp.ne.s32.totalorder %s319, %s320
      %p334 = scmp.eq.s32.totalorder %s34, 1
      %p335 = por %p333, %p334
      %p337 = scmp.ne.s32.totalorder %s320, %s336
      %p338 = scmp.eq.s32.totalorder %s34, 0
      %p339 = por %p337, %p338
      %p340 = scmp.le.s32.totalorder 1, %s28
      %p341 = scmp.lt.s32.totalorder %s28, 3
      %p342 = pnand %p340, %p341
      %p343 = pneg %p342
      // Predicated region
      $region9: #{transformer_block.1} parent=5 // pred_check
        _
      $region10: #{transformer_block.1} parent=5 // pred_check_branch
        %345 = sbr.rel (%p342) target = $region12
      $region11: #{transformer_block.1} parent=5 // pred_region
        %s346 = ssub.s32 %s28, 1
        // Predicated region
        $region13: #{transformer_block.1} parent=11 // pred_check
          %p347 = pneg %p75
        $region14: #{transformer_block.1} parent=11 // pred_check_branch
          %349 = sbr.rel (%p347) target = $region16
        $region15: #{transformer_block.1} parent=11 // pred_region
          %s351 = ssub.s32 16, 16
          %352 = vsyncadd [#allocation7], %s351
          %s354 = sshll.u32 [#allocation6], 4
          %s355 = int_to_ptr.vmem [resolvable:$true] %s354
          %357 = dma.hbm_to_vmem [thread:$0]  %s1, 16, %s355, [#allocation7]
        $region16: #{transformer_block.1} parent=11 // pred_fallthru
          _
        // Predicated region
        $region17: #{transformer_block.1} parent=11 // pred_check
          %p358 = pneg %p96
        $region18: #{transformer_block.1} parent=11 // pred_check_branch
          %360 = sbr.rel (%p358) target = $region20
        $region19: #{transformer_block.1} parent=11 // pred_region
          %s362 = ssub.s32 16, 16
          %363 = vsyncadd [#allocation7], %s362
          %s365 = sshll.u32 [#allocation8], 4
          %s366 = int_to_ptr.vmem [resolvable:$true] %s365
          %368 = dma.hbm_to_vmem [thread:$0]  %s2, 16, %s366, [#allocation7]
        $region20: #{transformer_block.1} parent=11 // pred_fallthru
          _
        // Predicated region
        $region21: #{transformer_block.1} parent=11 // pred_check
          %p369 = pneg %p117
        $region22: #{transformer_block.1} parent=11 // pred_check_branch
          %371 = sbr.rel (%p369) target = $region24
        $region23: #{transformer_block.1} parent=11 // pred_region
          %s373 = ssub.s32 3072, 3072
          %374 = vsyncadd [#allocation10], %s373
          %s375 = sshll.u32 [#allocation9], 4
          %s376 = int_to_ptr.vmem [resolvable:$true] %s375
          %381 = dma.hbm_to_vmem [thread:$0]  %s3, 3072, %s376, [#allocation10], 192, 192, 12
        $region24: #{transformer_block.1} parent=11 // pred_fallthru
          _
        // Predicated region
        $region25: #{transformer_block.1} parent=11 // pred_check
          %p382 = pneg %p138
        $region26: #{transformer_block.1} parent=11 // pred_check_branch
          %384 = sbr.rel (%p382) target = $region28
        $region27: #{transformer_block.1} parent=11 // pred_region
          _
        $region28: #{transformer_block.1} parent=11 // pred_fallthru
          _
        // Predicated region
        $region29: #{transformer_block.1} parent=11 // pred_check
          %p385 = pneg %p159
        $region30: #{transformer_block.1} parent=11 // pred_check_branch
          %387 = sbr.rel (%p385) target = $region32
        $region31: #{transformer_block.1} parent=11 // pred_region
          %s389 = ssub.s32 1024, 1024
          %390 = vsyncadd [#allocation10], %s389
          %s391 = sshll.u32 [#allocation11], 4
          %s392 = int_to_ptr.vmem [resolvable:$true] %s391
          %397 = dma.hbm_to_vmem [thread:$0]  %s5, 1024, %s392, [#allocation10], 64, 64, 4
        $region32: #{transformer_block.1} parent=11 // pred_fallthru
          _
        // Predicated region
        $region33: #{transformer_block.1} parent=11 // pred_check
          %p398 = pneg %p180
        $region34: #{transformer_block.1} parent=11 // pred_check_branch
          %400 = sbr.rel (%p398) target = $region36
        $region35: #{transformer_block.1} parent=11 // pred_region
          _
        $region36: #{transformer_block.1} parent=11 // pred_fallthru
          _
        // Predicated region
        $region37: #{transformer_block.1} parent=11 // pred_check
          %p401 = pneg %p201
        $region38: #{transformer_block.1} parent=11 // pred_check_branch
          %403 = sbr.rel (%p401) target = $region40
        $region39: #{transformer_block.1} parent=11 // pred_region
          _
        $region40: #{transformer_block.1} parent=11 // pred_fallthru
          _
        // Predicated region
        $region41: #{transformer_block.1} parent=11 // pred_check
          %p404 = pneg %p222
        $region42: #{transformer_block.1} parent=11 // pred_check_branch
          %406 = sbr.rel (%p404) target = $region44
        $region43: #{transformer_block.1} parent=11 // pred_region
          _
        $region44: #{transformer_block.1} parent=11 // pred_fallthru
          _
        // Predicated region
        $region45: #{transformer_block.1} parent=11 // pred_check
          %p407 = pneg %p243
        $region46: #{transformer_block.1} parent=11 // pred_check_branch
          %409 = sbr.rel (%p407) target = $region48
        $region47: #{transformer_block.1} parent=11 // pred_region
          %s411 = ssub.s32 4096, 4096
          %412 = vsyncadd [#allocation13], %s411
          %s413 = sshll.u32 [#allocation12], 4
          %s414 = int_to_ptr.vmem [resolvable:$true] %s413
          %419 = dma.hbm_to_vmem [thread:$0]  %s9, 4096, %s414, [#allocation13], 256, 256, 16
        $region48: #{transformer_block.1} parent=11 // pred_fallthru
          _
        // Predicated region
        $region49: #{transformer_block.1} parent=11 // pred_check
          %p420 = pneg %p264
        $region50: #{transformer_block.1} parent=11 // pred_check_branch
          %422 = sbr.rel (%p420) target = $region52
        $region51: #{transformer_block.1} parent=11 // pred_region
          _
        $region52: #{transformer_block.1} parent=11 // pred_fallthru
          _
        // Predicated region
        $region53: #{transformer_block.1} parent=11 // pred_check
          %p423 = pneg %p285
        $region54: #{transformer_block.1} parent=11 // pred_check_branch
          %425 = sbr.rel (%p423) target = $region56
        $region55: #{transformer_block.1} parent=11 // pred_region
          %s427 = ssub.s32 4096, 4096
          %428 = vsyncadd [#allocation13], %s427
          %s429 = sshll.u32 [#allocation14], 4
          %s430 = int_to_ptr.vmem [resolvable:$true] %s429
          %435 = dma.hbm_to_vmem [thread:$0]  %s11, 4096, %s430, [#allocation13], 64, 64, 4
        $region56: #{transformer_block.1} parent=11 // pred_fallthru
          _
        // Predicated region
        $region57: #{transformer_block.1} parent=11 // pred_check
          %p436 = pneg %p306
        $region58: #{transformer_block.1} parent=11 // pred_check_branch
          %438 = sbr.rel (%p436) target = $region60
        $region59: #{transformer_block.1} parent=11 // pred_region
          _
        $region60: #{transformer_block.1} parent=11 // pred_fallthru
          _
      $region12: #{transformer_block.1} parent=5 // pred_fallthru
        _
      %p439 = scmp.lt.s32.totalorder %s28, 2
      // Predicated region
      $region61: #{transformer_block.1} parent=5 // pred_check
        %p440 = pneg %p439
      $region62: #{transformer_block.1} parent=5 // pred_check_branch
        %442 = sbr.rel (%p440) target = $region64
      $region63: #{transformer_block.1} parent=5 // pred_region
        // Predicated region
        $region65: #{transformer_block.1} parent=63 // pred_check
          %p443 = pneg %p48
        $region66: #{transformer_block.1} parent=63 // pred_check_branch
          %445 = sbr.rel (%p443) target = $region68
        $region67: #{transformer_block.1} parent=63 // pred_region
          %s446 = sand.u32 %s38, 1
          %s447 = scalar_lea.sflag [#allocation4], %s446
          %s448 = sand.u32 %s38, 1
          %s449 = smul.addr %s448, 8
          %s450 = scalar_lea.vmem [#allocation3], %s449
          %s452 = ssub.s32 128, 128
          %453 = vsyncadd %s447, %s452
          %s454 = smul.addr %s28, 128
          %s455 = scalar_lea.hbm %s0, %s454
          %s457 = sshll.u32 %s450, 4
          %s458 = int_to_ptr.vmem [resolvable:$true] %s457
          %460 = dma.hbm_to_vmem [thread:$0]  %s455, 128, %s458, %s447
        $region68: #{transformer_block.1} parent=63 // pred_fallthru
          _
      $region64: #{transformer_block.1} parent=5 // pred_fallthru
        _
      %p461 = scmp.le.s32.totalorder 1, %s28
      %p462 = scmp.lt.s32.totalorder %s28, 3
      %p463 = pnand %p461, %p462
      %p464 = pneg %p463
      // Predicated region
      $region69: #{transformer_block.1} parent=5 // pred_check
        _
      $region70: #{transformer_block.1} parent=5 // pred_check_branch
        %466 = sbr.rel (%p463) target = $region72
      $region71: #{transformer_block.1} parent=5 // pred_region
        %s467 = ssub.s32 %s28, 1
        %s468 = sand.u32 %s41, 1
        %s469 = scalar_lea.sflag [#allocation4], %s468
        %s470 = sand.u32 %s41, 1
        %s471 = smul.addr %s470, 8
        %s472 = scalar_lea.vmem [#allocation3], %s471
        // Predicated region
        $region73: #{transformer_block.1} parent=71 // pred_check
          %p473 = pneg %p54
        $region74: #{transformer_block.1} parent=71 // pred_check_branch
          %475 = sbr.rel (%p473) target = $region76
        $region75: #{transformer_block.1} parent=71 // pred_region
          %476 = dma.done %s469, 128
        $region76: #{transformer_block.1} parent=71 // pred_fallthru
          _
        // Predicated region
        $region77: #{transformer_block.1} parent=71 // pred_check
          %p477 = pneg %p75
        $region78: #{transformer_block.1} parent=71 // pred_check_branch
          %479 = sbr.rel (%p477) target = $region80
        $region79: #{transformer_block.1} parent=71 // pred_region
          %480 = dma.done [#allocation7], 16
        $region80: #{transformer_block.1} parent=71 // pred_fallthru
          _
        // Predicated region
        $region81: #{transformer_block.1} parent=71 // pred_check
          %p481 = pneg %p96
        $region82: #{transformer_block.1} parent=71 // pred_check_branch
          %483 = sbr.rel (%p481) target = $region84
        $region83: #{transformer_block.1} parent=71 // pred_region
          %484 = dma.done [#allocation7], 16
        $region84: #{transformer_block.1} parent=71 // pred_fallthru
          _
        // Predicated region
        $region85: #{transformer_block.1} parent=71 // pred_check
          %p485 = pneg %p117
        $region86: #{transformer_block.1} parent=71 // pred_check_branch
          %487 = sbr.rel (%p485) target = $region88
        $region87: #{transformer_block.1} parent=71 // pred_region
          %488 = dma.done [#allocation10], 3072
        $region88: #{transformer_block.1} parent=71 // pred_fallthru
          _
        // Predicated region
        $region89: #{transformer_block.1} parent=71 // pred_check
          %p489 = pneg %p159
        $region90: #{transformer_block.1} parent=71 // pred_check_branch
          %491 = sbr.rel (%p489) target = $region92
        $region91: #{transformer_block.1} parent=71 // pred_region
          %492 = dma.done [#allocation10], 1024
        $region92: #{transformer_block.1} parent=71 // pred_fallthru
          _
        // Predicated region
        $region93: #{transformer_block.1} parent=71 // pred_check
          %p493 = pneg %p243
        $region94: #{transformer_block.1} parent=71 // pred_check_branch
          %495 = sbr.rel (%p493) target = $region96
        $region95: #{transformer_block.1} parent=71 // pred_region
          %496 = dma.done [#allocation13], 4096
        $region96: #{transformer_block.1} parent=71 // pred_fallthru
          _
        // Predicated region
        $region97: #{transformer_block.1} parent=71 // pred_check
          %p497 = pneg %p285
        $region98: #{transformer_block.1} parent=71 // pred_check_branch
          %499 = sbr.rel (%p497) target = $region100
        $region99: #{transformer_block.1} parent=71 // pred_region
          %500 = dma.done [#allocation13], 4096
        $region100: #{transformer_block.1} parent=71 // pred_fallthru
          _
        %s501 = sand.u32 %s41, 1
        %s502 = scalar_lea.sflag [#allocation4], %s501
        %s503 = sand.u32 %s41, 1
        %s504 = smul.addr %s503, 8
        %s505 = scalar_lea.vmem [#allocation3], %s504
        %p506 = pneg %p54
        %p507 = pneg %p51
        %p508 = pneg %p75
        %p509 = pneg %p72
        %p510 = pneg %p96
        %p511 = pneg %p93
        %p512 = pneg %p117
        %p513 = pneg %p114
        %p514 = pneg %p138
        %p515 = pneg %p135
        %p516 = pneg %p159
        %p517 = pneg %p156
        %p518 = pneg %p180
        %p519 = pneg %p177
        %p520 = pneg %p201
        %p521 = pneg %p198
        %p522 = pneg %p222
        %p523 = pneg %p219
        %p524 = pneg %p243
        %p525 = pneg %p240
        %p526 = pneg %p264
        %p527 = pneg %p261
        %p528 = pneg %p285
        %p529 = pneg %p282
        %p530 = pneg %p306
        %p531 = pneg %p303
        %p532 = pneg %p332
        %p533 = pneg %p329
        %s534 = sand.u32 %s319, 1
        %s535 = scalar_lea.sflag [#allocation5], %s534
        %s536 = sand.u32 %s319, 1
        %s537 = smul.addr %s536, 8
        %s538 = scalar_lea.vmem [#allocation15], %s537
        %v540 = vld [vmem:[%s472] sm:$0xff]
        %v541 = vld [vmem:[#allocation6] sm:$0x1]
        %v542 = vld [vmem:[#allocation8] sm:$0x1]
        %543 = vadd.xlane.f32.xlu0 %v540
        %v544 = vpop.xlane.xlu0 %543
        %v545 = vmul.f32 %v540, %v540
        %546 = vadd.xlane.f32.xlu0 %v545
        %v547 = vpop.xlane.xlu0 %546
        %v548 = vmul.f32 %v544, 0.0078125
        %v549 = vmul.f32 %v547, 0.0078125
        %v550 = vmul.f32 %v548, %v548
        %v551 = vsub.f32 %v549, %v550
        %v552 = vsub.f32 %v540, %v548
        %v553 = vadd.f32 %v551, 1e-05
        %v554 = vrsqrt.pop %v553
        %v555 = vmul.f32 %v552, %v554
        %v557 = vlaneseq
        %v558 = vshrl.u32 %v557, 7
        %v559 = vsub.s32 0, %v558
        %v560 = vrot.slane %v541, %v559
        %v562 = vmul.f32 %v555, %v560
        %v564 = vlaneseq
        %v565 = vshrl.u32 %v564, 7
        %v566 = vsub.s32 0, %v565
        %v567 = vrot.slane %v542, %v566
        %v569 = vadd.f32 %v562, %v567
        %v570 = vpack.c.bf16 %v569, %v569
        %v571 = vld [vmem:[#allocation9] sm:$0xff]
        %v572 = vld [vmem:[#allocation9 + $0x8] sm:$0xf]
        %v573 = vld [vmem:[#allocation9 + $0xc] sm:$0xff]
        %v574 = vld [vmem:[#allocation9 + $0x14] sm:$0xf]
        %v575 = vld [vmem:[#allocation9 + $0x18] sm:$0xff]
        %v576 = vld [vmem:[#allocation9 + $0x20] sm:$0xf]
        %v577 = vld [vmem:[#allocation9 + $0x24] sm:$0xff]
        %v578 = vld [vmem:[#allocation9 + $0x2c] sm:$0xf]
        %v579 = vld [vmem:[#allocation9 + $0x30] sm:$0xff]
        %v580 = vld [vmem:[#allocation9 + $0x38] sm:$0xf]
        %v581 = vld [vmem:[#allocation9 + $0x3c] sm:$0xff]
        %v582 = vld [vmem:[#allocation9 + $0x44] sm:$0xf]
        %v583 = vld [vmem:[#allocation9 + $0x48] sm:$0xff]
        %v584 = vld [vmem:[#allocation9 + $0x50] sm:$0xf]
        %v585 = vld [vmem:[#allocation9 + $0x54] sm:$0xff]
        %v586 = vld [vmem:[#allocation9 + $0x5c] sm:$0xf]
        %v587 = vld [vmem:[#allocation9 + $0x60] sm:$0xff]
        %v588 = vld [vmem:[#allocation9 + $0x68] sm:$0xf]
        %v589 = vld [vmem:[#allocation9 + $0x6c] sm:$0xff]
        %v590 = vld [vmem:[#allocation9 + $0x74] sm:$0xf]
        %v591 = vld [vmem:[#allocation9 + $0x78] sm:$0xff]
        %v592 = vld [vmem:[#allocation9 + $0x80] sm:$0xf]
        %v593 = vld [vmem:[#allocation9 + $0x84] sm:$0xff]
        %v594 = vld [vmem:[#allocation9 + $0x8c] sm:$0xf]
        %v595 = vld [vmem:[#allocation9 + $0x90] sm:$0xff]
        %v596 = vld [vmem:[#allocation9 + $0x98] sm:$0xf]
        %v597 = vld [vmem:[#allocation9 + $0x9c] sm:$0xff]
        %v598 = vld [vmem:[#allocation9 + $0xa4] sm:$0xf]
        %v599 = vld [vmem:[#allocation9 + $0xa8] sm:$0xff]
        %v600 = vld [vmem:[#allocation9 + $0xb0] sm:$0xf]
        %v601 = vld [vmem:[#allocation9 + $0xb4] sm:$0xff]
        %v602 = vld [vmem:[#allocation9 + $0xbc] sm:$0xf]
        %v603 = vld [vmem:[%s4] sm:$0x7]
        %v605 = vlaneseq
        %v606 = vshrl.u32 %v605, 7
        %v607 = vsub.s32 0, %v606
        %v608 = vrot.slane %v603, %v607
        %v609 = vlaneseq
        %v610 = vshrl.u32 %v609, 7
        %v611 = vsub.s32 1, %v610
        %v612 = vrot.slane %v603, %v611
        %v613 = vlaneseq
        %v614 = vshrl.u32 %v613, 7
        %v615 = vsub.s32 2, %v614
        %v616 = vrot.slane %v603, %v615
        %v652 = vunpack.c.l.b16 %v571
        %v653 = vunpack.c.h.b16 %v571
        %v654 = vunpack.c.l.b16 %v572
        %v655 = vunpack.c.l.b16 %v573
        %v656 = vunpack.c.h.b16 %v573
        %v657 = vunpack.c.l.b16 %v574
        %v658 = vunpack.c.l.b16 %v575
        %v659 = vunpack.c.h.b16 %v575
        %v660 = vunpack.c.l.b16 %v576
        %v661 = vunpack.c.l.b16 %v577
        %v662 = vunpack.c.h.b16 %v577
        %v663 = vunpack.c.l.b16 %v578
        %v664 = vunpack.c.l.b16 %v579
        %v665 = vunpack.c.h.b16 %v579
        %v666 = vunpack.c.l.b16 %v580
        %v667 = vunpack.c.l.b16 %v581
        %v668 = vunpack.c.h.b16 %v581
        %v669 = vunpack.c.l.b16 %v582
        %v670 = vunpack.c.l.b16 %v583
        %v671 = vunpack.c.h.b16 %v583
        %v672 = vunpack.c.l.b16 %v584
        %v673 = vunpack.c.l.b16 %v585
        %v674 = vunpack.c.h.b16 %v585
        %v675 = vunpack.c.l.b16 %v586
        %v676 = vunpack.c.l.b16 %v587
        %v677 = vunpack.c.h.b16 %v587
        %v678 = vunpack.c.l.b16 %v588
        %v679 = vunpack.c.l.b16 %v589
        %v680 = vunpack.c.h.b16 %v589
        %v681 = vunpack.c.l.b16 %v590
        %v682 = vunpack.c.l.b16 %v591
        %v683 = vunpack.c.h.b16 %v591
        %v684 = vunpack.c.l.b16 %v592
        %v685 = vunpack.c.l.b16 %v593
        %v686 = vunpack.c.h.b16 %v593
        %v687 = vunpack.c.l.b16 %v594
        %v688 = vunpack.c.l.b16 %v595
        %v689 = vunpack.c.h.b16 %v595
        %v690 = vunpack.c.l.b16 %v596
        %v691 = vunpack.c.l.b16 %v597
        %v692 = vunpack.c.h.b16 %v597
        %v693 = vunpack.c.l.b16 %v598
        %v694 = vunpack.c.l.b16 %v599
        %v695 = vunpack.c.h.b16 %v599
        %v696 = vunpack.c.l.b16 %v600
        %v697 = vunpack.c.l.b16 %v601
        %v698 = vunpack.c.h.b16 %v601
        %v699 = vunpack.c.l.b16 %v602
        %v700 = vpack.c.b16 %v655, %v652
        %v701 = vpack.c.b16 %v656, %v653
        %v702 = vpack.c.b16 %v657, %v654
        %v703 = vpack.c.b16 %v661, %v658
        %v704 = vpack.c.b16 %v662, %v659
        %v705 = vpack.c.b16 %v663, %v660
        %v706 = vpack.c.b16 %v667, %v664
        %v707 = vpack.c.b16 %v668, %v665
        %v708 = vpack.c.b16 %v669, %v666
        %v709 = vpack.c.b16 %v673, %v670
        %v710 = vpack.c.b16 %v674, %v671
        %v711 = vpack.c.b16 %v675, %v672
        %v712 = vpack.c.b16 %v679, %v676
        %v713 = vpack.c.b16 %v680, %v677
        %v714 = vpack.c.b16 %v681, %v678
        %v715 = vpack.c.b16 %v685, %v682
        %v716 = vpack.c.b16 %v686, %v683
        %v717 = vpack.c.b16 %v687, %v684
        %v718 = vpack.c.b16 %v691, %v688
        %v719 = vpack.c.b16 %v692, %v689
        %v720 = vpack.c.b16 %v693, %v690
        %v721 = vpack.c.b16 %v697, %v694
        %v722 = vpack.c.b16 %v698, %v695
        %v723 = vpack.c.b16 %v699, %v696
        %748 = vmatprep.subr.bf16.mxu0 %v701
        %749 = vmatpush1.bf16.msra.mxu0 %v700
        %750 = vmatprep.subr.bf16.mxu0 %v704
        %751 = vmatpush1.bf16.msra.mxu0 %v703
        %752 = vmatprep.subr.bf16.mxu0 %v707
        %753 = vmatpush1.bf16.msra.mxu0 %v706
        %754 = vmatprep.subr.bf16.mxu0 %v710
        %755 = vmatpush1.bf16.msra.mxu0 %v709
        %756 = vmatprep.subr.bf16.mxu0 %v713
        %757 = vmatpush1.bf16.msra.mxu0 %v712
        %758 = vmatprep.subr.bf16.mxu0 %v716
        %759 = vmatpush1.bf16.msra.mxu0 %v715
        %760 = vmatprep.subr.bf16.mxu0 %v719
        %761 = vmatpush1.bf16.msra.mxu0 %v718
        %762 = vmatprep.subr.bf16.mxu0 %v722
        %763 = vmatpush1.bf16.msra.mxu0 %v721
        %764 = vmatprep.subr.bf16.mxu0 0
        %765 = vmatpush1.bf16.msra.mxu0 0
        %766 = vmatprep.subr.bf16.mxu0 0
        %767 = vmatpush1.bf16.msra.mxu0 0
        %768 = vmatprep.subr.bf16.mxu0 0
        %769 = vmatpush1.bf16.msra.mxu0 0
        %770 = vmatprep.subr.bf16.mxu0 0
        %771 = vmatpush1.bf16.msra.mxu0 0
        %772 = vmatprep.subr.bf16.mxu0 0
        %773 = vmatpush1.bf16.msra.mxu0 0
        %774 = vmatprep.subr.bf16.mxu0 0
        %775 = vmatpush1.bf16.msra.mxu0 0
        %776 = vmatprep.subr.bf16.mxu0 0
        %777 = vmatpush1.bf16.msra.mxu0 0
        %778 = vmatprep.subr.bf16.mxu0 0
        %779 = vmatpush1.bf16.msra.mxu0 0
        %780 = vmatprep.mubr.bf16.mxu0 0
        %781 = vmatmul.mubr.bf16.gmra.mrb[0].mxu0 %v570
        %v782 = vpop.f32.mrb[0].mxu0
        %v783 = vadd.f32 %v608, %v782
        %v784 = vpop.f32.mrb[0].mxu0
        %v785 = vadd.f32 %v612, %v784
        %v786 = vpop.f32.mrb[0].mxu0
        %v787 = vpop.f32.mrb[0].mxu0
        %788 = vdwg.mxu0
        %789 = vmatprep.subr.bf16.mxu0 0
        %790 = vmatpush1.bf16.msra.mxu0 %v702
        %791 = vmatprep.subr.bf16.mxu0 0
        %792 = vmatpush1.bf16.msra.mxu0 %v705
        %793 = vmatprep.subr.bf16.mxu0 0
        %794 = vmatpush1.bf16.msra.mxu0 %v708
        %795 = vmatprep.subr.bf16.mxu0 0
        %796 = vmatpush1.bf16.msra.mxu0 %v711
        %797 = vmatprep.subr.bf16.mxu0 0
        %798 = vmatpush1.bf16.msra.mxu0 %v714
        %799 = vmatprep.subr.bf16.mxu0 0
        %800 = vmatpush1.bf16.msra.mxu0 %v717
        %801 = vmatprep.subr.bf16.mxu0 0
        %802 = vmatpush1.bf16.msra.mxu0 %v720
        %803 = vmatprep.subr.bf16.mxu0 0
        %804 = vmatpush1.bf16.msra.mxu0 %v723
        %805 = vmatprep.subr.bf16.mxu0 0
        %806 = vmatpush1.bf16.msra.mxu0 0
        %807 = vmatprep.subr.bf16.mxu0 0
        %808 = vmatpush1.bf16.msra.mxu0 0
        %809 = vmatprep.subr.bf16.mxu0 0
        %810 = vmatpush1.bf16.msra.mxu0 0
        %811 = vmatprep.subr.bf16.mxu0 0
        %812 = vmatpush1.bf16.msra.mxu0 0
        %813 = vmatprep.subr.bf16.mxu0 0
        %814 = vmatpush1.bf16.msra.mxu0 0
        %815 = vmatprep.subr.bf16.mxu0 0
        %816 = vmatpush1.bf16.msra.mxu0 0
        %817 = vmatprep.subr.bf16.mxu0 0
        %818 = vmatpush1.bf16.msra.mxu0 0
        %819 = vmatprep.subr.bf16.mxu0 0
        %820 = vmatpush1.bf16.msra.mxu0 0
        %821 = vmatprep.mubr.bf16.mxu0 0
        %822 = vmatmul.mubr.bf16.gmra.mrb[0].mxu0 %v570
        %v823 = vpop.f32.mrb[0].mxu0
        %v824 = vadd.f32 %v616, %v823
        %v825 = vpop.f32.mrb[0].mxu0
        %v826 = vpop.f32.mrb[0].mxu0
        %v827 = vpop.f32.mrb[0].mxu0
        %828 = vdwg.mxu0
        %v829 = vpack.c.bf16 %v783, %v783
        %v830 = vpack.c.bf16 %v785, %v785
        %v831 = vpack.c.bf16 %v824, %v824
        %vm832 = vcmask 261120
        %v834 = vsel %vm832, %v829, 0
        %v837 = vsel %vm832, %v830, 0
        %839 = vmatprep.subr.bf16.mxu0 0
        %840 = vmatpush1.bf16.xpose.msra.mxu0 %v837
        %841 = vmatprep.subr.bf16.mxu0 0
        %842 = vmatpush1.bf16.xpose.msra.mxu0 0
        %843 = vmatprep.subr.bf16.mxu0 0
        %844 = vmatpush1.bf16.xpose.msra.mxu0 0
        %845 = vmatprep.subr.bf16.mxu0 0
        %846 = vmatpush1.bf16.xpose.msra.mxu0 0
        %847 = vmatprep.subr.bf16.mxu0 0
        %848 = vmatpush1.bf16.xpose.msra.mxu0 0
        %849 = vmatprep.subr.bf16.mxu0 0
        %850 = vmatpush1.bf16.xpose.msra.mxu0 0
        %851 = vmatprep.subr.bf16.mxu0 0
        %852 = vmatpush1.bf16.xpose.msra.mxu0 0
        %853 = vmatprep.subr.bf16.mxu0 0
        %854 = vmatpush1.bf16.xpose.msra.mxu0 0
        %855 = vmatprep.subr.bf16.mxu0 0
        %856 = vmatpush1.bf16.xpose.msra.mxu0 0
        %857 = vmatprep.subr.bf16.mxu0 0
        %858 = vmatpush1.bf16.xpose.msra.mxu0 0
        %859 = vmatprep.subr.bf16.mxu0 0
        %860 = vmatpush1.bf16.xpose.msra.mxu0 0
        %861 = vmatprep.subr.bf16.mxu0 0
        %862 = vmatpush1.bf16.xpose.msra.mxu0 0
        %863 = vmatprep.subr.bf16.mxu0 0
        %864 = vmatpush1.bf16.xpose.msra.mxu0 0
        %865 = vmatprep.subr.bf16.mxu0 0
        %866 = vmatpush1.bf16.xpose.msra.mxu0 0
        %867 = vmatprep.subr.bf16.mxu0 0
        %868 = vmatpush1.bf16.xpose.msra.mxu0 0
        %869 = vmatprep.subr.bf16.mxu0 0
        %870 = vmatpush1.bf16.xpose.msra.mxu0 0
        %871 = vmatprep.mubr.bf16.mxu0 0
        %872 = vmatmul.mubr.bf16.gmra.mrb[0].mxu0 %v834
        %v873 = vpop.f32.mrb[0].mxu0
        %v874 = vadd.f32 0.0, %v873
        %v875 = vpop.f32.mrb[0].mxu0
        %v876 = vpop.f32.mrb[0].mxu0
        %v877 = vpop.f32.mrb[0].mxu0
        %878 = vdwg.mxu0
        %vm879 = vcmask 64512
        %v880 = vsel %vm879, %v874, -inf
        %881 = vmax.xlane.f32.xlu0 %v880
        %v882 = vpop.xlane.xlu0 %881
        %v883 = vsub.f32 %v874, %v882
        %v884 = vmul.f32 %v883, 1.442695
        %v885 = vpow.pop %v884
        %v886 = vsel %vm879, %v885, 0.0
        %887 = vadd.xlane.f32.xlu0 %v886
        %v888 = vpop.xlane.xlu0 %887
        %v889 = vrcp.pop %v888
        %v890 = vmul.f32 %v885, %v889
        %v891 = vpack.c.bf16 %v890, %v890
        %v893 = vsel %vm879, %v891, 0
        %vm895 = vcmask 1043456
        %v897 = vsel %vm895, %v831, 0
        %899 = vmatprep.subr.bf16.mxu0 0
        %900 = vmatpush1.bf16.msra.mxu0 %v897
        %901 = vmatprep.subr.bf16.mxu0 0
        %902 = vmatpush1.bf16.msra.mxu0 0
        %903 = vmatprep.subr.bf16.mxu0 0
        %904 = vmatpush1.bf16.msra.mxu0 0
        %905 = vmatprep.subr.bf16.mxu0 0
        %906 = vmatpush1.bf16.msra.mxu0 0
        %907 = vmatprep.subr.bf16.mxu0 0
        %908 = vmatpush1.bf16.msra.mxu0 0
        %909 = vmatprep.subr.bf16.mxu0 0
        %910 = vmatpush1.bf16.msra.mxu0 0
        %911 = vmatprep.subr.bf16.mxu0 0
        %912 = vmatpush1.bf16.msra.mxu0 0
        %913 = vmatprep.subr.bf16.mxu0 0
        %914 = vmatpush1.bf16.msra.mxu0 0
        %915 = vmatprep.subr.bf16.mxu0 0
        %916 = vmatpush1.bf16.msra.mxu0 0
        %917 = vmatprep.subr.bf16.mxu0 0
        %918 = vmatpush1.bf16.msra.mxu0 0
        %919 = vmatprep.subr.bf16.mxu0 0
        %920 = vmatpush1.bf16.msra.mxu0 0
        %921 = vmatprep.subr.bf16.mxu0 0
        %922 = vmatpush1.bf16.msra.mxu0 0
        %923 = vmatprep.subr.bf16.mxu0 0
        %924 = vmatpush1.bf16.msra.mxu0 0
        %925 = vmatprep.subr.bf16.mxu0 0
        %926 = vmatpush1.bf16.msra.mxu0 0
        %927 = vmatprep.subr.bf16.mxu0 0
        %928 = vmatpush1.bf16.msra.mxu0 0
        %929 = vmatprep.subr.bf16.mxu0 0
        %930 = vmatpush1.bf16.msra.mxu0 0
        %931 = vmatprep.mubr.bf16.mxu0 0
        %932 = vmatmul.mubr.bf16.gmra.mrb[0].mxu0 %v893
        %v933 = vpop.f32.mrb[0].mxu0
        %v934 = vadd.f32 0.0, %v933
        %v935 = vpop.f32.mrb[0].mxu0
        %v936 = vpop.f32.mrb[0].mxu0
        %v937 = vpop.f32.mrb[0].mxu0
        %938 = vdwg.mxu0
        %939 = vst.msk [vmem:[#allocation2] sm:$0xff] %vm832, %v934
        %941 = vrot.lane.b32.xlu0 %v829, 96
        %v942 = vpop.permute.xlu0 %941
        %944 = vrot.lane.b32.xlu0 %v830, 96
        %v945 = vpop.permute.xlu0 %944
        %v947 = vsel %vm832, %v942, 0
        %v950 = vsel %vm832, %v945, 0
        %952 = vmatprep.subr.bf16.mxu0 0
        %953 = vmatpush1.bf16.xpose.msra.mxu0 %v950
        %954 = vmatprep.subr.bf16.mxu0 0
        %955 = vmatpush1.bf16.xpose.msra.mxu0 0
        %956 = vmatprep.subr.bf16.mxu0 0
        %957 = vmatpush1.bf16.xpose.msra.mxu0 0
        %958 = vmatprep.subr.bf16.mxu0 0
        %959 = vmatpush1.bf16.xpose.msra.mxu0 0
        %960 = vmatprep.subr.bf16.mxu0 0
        %961 = vmatpush1.bf16.xpose.msra.mxu0 0
        %962 = vmatprep.subr.bf16.mxu0 0
        %963 = vmatpush1.bf16.xpose.msra.mxu0 0
        %964 = vmatprep.subr.bf16.mxu0 0
        %965 = vmatpush1.bf16.xpose.msra.mxu0 0
        %966 = vmatprep.subr.bf16.mxu0 0
        %967 = vmatpush1.bf16.xpose.msra.mxu0 0
        %968 = vmatprep.subr.bf16.mxu0 0
        %969 = vmatpush1.bf16.xpose.msra.mxu0 0
        %970 = vmatprep.subr.bf16.mxu0 0
        %971 = vmatpush1.bf16.xpose.msra.mxu0 0
        %972 = vmatprep.subr.bf16.mxu0 0
        %973 = vmatpush1.bf16.xpose.msra.mxu0 0
        %974 = vmatprep.subr.bf16.mxu0 0
        %975 = vmatpush1.bf16.xpose.msra.mxu0 0
        %976 = vmatprep.subr.bf16.mxu0 0
        %977 = vmatpush1.bf16.xpose.msra.mxu0 0
        %978 = vmatprep.subr.bf16.mxu0 0
        %979 = vmatpush1.bf16.xpose.msra.mxu0 0
        %980 = vmatprep.subr.bf16.mxu0 0
        %981 = vmatpush1.bf16.xpose.msra.mxu0 0
        %982 = vmatprep.subr.bf16.mxu0 0
        %983 = vmatpush1.bf16.xpose.msra.mxu0 0
        %984 = vmatprep.mubr.bf16.mxu0 0
        %985 = vmatmul.mubr.bf16.gmra.mrb[0].mxu0 %v947
        %v986 = vpop.f32.mrb[0].mxu0
        %v987 = vadd.f32 0.0, %v986
        %v988 = vpop.f32.mrb[0].mxu0
        %v989 = vpop.f32.mrb[0].mxu0
        %v990 = vpop.f32.mrb[0].mxu0
        %991 = vdwg.mxu0
        %v992 = vsel %vm879, %v987, -inf
        %993 = vmax.xlane.f32.xlu0 %v992
        %v994 = vpop.xlane.xlu0 %993
        %v995 = vsub.f32 %v987, %v994
        %v996 = vmul.f32 %v995, 1.442695
        %v997 = vpow.pop %v996
        %v998 = vsel %vm879, %v997, 0.0
        %999 = vadd.xlane.f32.xlu0 %v998
        %v1000 = vpop.xlane.xlu0 %999
        %v1001 = vrcp.pop %v1000
        %v1002 = vmul.f32 %v997, %v1001
        %v1003 = vpack.c.bf16 %v1002, %v1002
        %1005 = vrot.lane.b32.xlu0 %v831, 96
        %v1006 = vpop.permute.xlu0 %1005
        %v1008 = vsel %vm879, %v1003, 0
        %v1011 = vsel %vm895, %v1006, 0
        %1013 = vmatprep.subr.bf16.mxu0 0
        %1014 = vmatpush1.bf16.msra.mxu0 %v1011
        %1015 = vmatprep.subr.bf16.mxu0 0
        %1016 = vmatpush1.bf16.msra.mxu0 0
        %1017 = vmatprep.subr.bf16.mxu0 0
        %1018 = vmatpush1.bf16.msra.mxu0 0
        %1019 = vmatprep.subr.bf16.mxu0 0
        %1020 = vmatpush1.bf16.msra.mxu0 0
        %1021 = vmatprep.subr.bf16.mxu0 0
        %1022 = vmatpush1.bf16.msra.mxu0 0
        %1023 = vmatprep.subr.bf16.mxu0 0
        %1024 = vmatpush1.bf16.msra.mxu0 0
        %1025 = vmatprep.subr.bf16.mxu0 0
        %1026 = vmatpush1.bf16.msra.mxu0 0
        %1027 = vmatprep.subr.bf16.mxu0 0
        %1028 = vmatpush1.bf16.msra.mxu0 0
        %1029 = vmatprep.subr.bf16.mxu0 0
        %1030 = vmatpush1.bf16.msra.mxu0 0
        %1031 = vmatprep.subr.bf16.mxu0 0
        %1032 = vmatpush1.bf16.msra.mxu0 0
        %1033 = vmatprep.subr.bf16.mxu0 0
        %1034 = vmatpush1.bf16.msra.mxu0 0
        %1035 = vmatprep.subr.bf16.mxu0 0
        %1036 = vmatpush1.bf16.msra.mxu0 0
        %1037 = vmatprep.subr.bf16.mxu0 0
        %1038 = vmatpush1.bf16.msra.mxu0 0
        %1039 = vmatprep.subr.bf16.mxu0 0
        %1040 = vmatpush1.bf16.msra.mxu0 0
        %1041 = vmatprep.subr.bf16.mxu0 0
        %1042 = vmatpush1.bf16.msra.mxu0 0
        %1043 = vmatprep.subr.bf16.mxu0 0
        %1044 = vmatpush1.bf16.msra.mxu0 0
        %1045 = vmatprep.mubr.bf16.mxu0 0
        %1046 = vmatmul.mubr.bf16.gmra.mrb[0].mxu0 %v1008
        %v1047 = vpop.f32.mrb[0].mxu0
        %v1048 = vadd.f32 0.0, %v1047
        %v1049 = vpop.f32.mrb[0].mxu0
        %v1050 = vpop.f32.mrb[0].mxu0
        %v1051 = vpop.f32.mrb[0].mxu0
        %1052 = vdwg.mxu0
        %1054 = vrot.lane.b32.xlu0 %v1048, 32
        %v1055 = vpop.permute.xlu0 %1054
        %vm1057 = vcmask 523520
        %1058 = vst.msk [vmem:[#allocation2] sm:$0xff] %vm1057, %v1055
        %1059 = vrot.lane.b32.xlu0 %v829, 64
        %v1060 = vpop.permute.xlu0 %1059
        %1061 = vrot.lane.b32.xlu0 %v830, 64
        %v1062 = vpop.permute.xlu0 %1061
        %v1064 = vsel %vm832, %v1060, 0
        %v1067 = vsel %vm832, %v1062, 0
        %1069 = vmatprep.subr.bf16.mxu0 0
        %1070 = vmatpush1.bf16.xpose.msra.mxu0 %v1067
        %1071 = vmatprep.subr.bf16.mxu0 0
        %1072 = vmatpush1.bf16.xpose.msra.mxu0 0
        %1073 = vmatprep.subr.bf16.mxu0 0
        %1074 = vmatpush1.bf16.xpose.msra.mxu0 0
        %1075 = vmatprep.subr.bf16.mxu0 0
        %1076 = vmatpush1.bf16.xpose.msra.mxu0 0
        %1077 = vmatprep.subr.bf16.mxu0 0
        %1078 = vmatpush1.bf16.xpose.msra.mxu0 0
        %1079 = vmatprep.subr.bf16.mxu0 0
        %1080 = vmatpush1.bf16.xpose.msra.mxu0 0
        %1081 = vmatprep.subr.bf16.mxu0 0
        %1082 = vmatpush1.bf16.xpose.msra.mxu0 0
        %1083 = vmatprep.subr.bf16.mxu0 0
        %1084 = vmatpush1.bf16.xpose.msra.mxu0 0
        %1085 = vmatprep.subr.bf16.mxu0 0
        %1086 = vmatpush1.bf16.xpose.msra.mxu0 0
        %1087 = vmatprep.subr.bf16.mxu0 0
        %1088 = vmatpush1.bf16.xpose.msra.mxu0 0
        %1089 = vmatprep.subr.bf16.mxu0 0
        %1090 = vmatpush1.bf16.xpose.msra.mxu0 0
        %1091 = vmatprep.subr.bf16.mxu0 0
        %1092 = vmatpush1.bf16.xpose.msra.mxu0 0
        %1093 = vmatprep.subr.bf16.mxu0 0
        %1094 = vmatpush1.bf16.xpose.msra.mxu0 0
        %1095 = vmatprep.subr.bf16.mxu0 0
        %1096 = vmatpush1.bf16.xpose.msra.mxu0 0
        %1097 = vmatprep.subr.bf16.mxu0 0
        %1098 = vmatpush1.bf16.xpose.msra.mxu0 0
        %1099 = vmatprep.subr.bf16.mxu0 0
        %1100 = vmatpush1.bf16.xpose.msra.mxu0 0
        %1101 = vmatprep.mubr.bf16.mxu0 0
        %1102 = vmatmul.mubr.bf16.gmra.mrb[0].mxu0 %v1064
        %v1103 = vpop.f32.mrb[0].mxu0
        %v1104 = vadd.f32 0.0, %v1103
        %v1105 = vpop.f32.mrb[0].mxu0
        %v1106 = vpop.f32.mrb[0].mxu0
        %v1107 = vpop.f32.mrb[0].mxu0
        %1108 = vdwg.mxu0
        %v1109 = vsel %vm879, %v1104, -inf
        %1110 = vmax.xlane.f32.xlu0 %v1109
        %v1111 = vpop.xlane.xlu0 %1110
        %v1112 = vsub.f32 %v1104, %v1111
        %v1113 = vmul.f32 %v1112, 1.442695
        %v1114 = vpow.pop %v1113
        %v1115 = vsel %vm879, %v1114, 0.0
        %1116 = vadd.xlane.f32.xlu0 %v1115
        %v1117 = vpop.xlane.xlu0 %1116
        %v1118 = vrcp.pop %v1117
        %v1119 = vmul.f32 %v1114, %v1118
        %v1120 = vpack.c.bf16 %v1119, %v1119
        %1121 = vrot.lane.b32.xlu0 %v831, 64
        %v1122 = vpop.permute.xlu0 %1121
        %v1124 = vsel %vm879, %v1120, 0
        %v1127 = vsel %vm895, %v1122, 0
        %1129 = vmatprep.subr.bf16.mxu0 0
        %1130 = vmatpush1.bf16.msra.mxu0 %v1127
        %1131 = vmatprep.subr.bf16.mxu0 0
        %1132 = vmatpush1.bf16.msra.mxu0 0
        %1133 = vmatprep.subr.bf16.mxu0 0
        %1134 = vmatpush1.bf16.msra.mxu0 0
        %1135 = vmatprep.subr.bf16.mxu0 0
        %1136 = vmatpush1.bf16.msra.mxu0 0
        %1137 = vmatprep.subr.bf16.mxu0 0
        %1138 = vmatpush1.bf16.msra.mxu0 0
        %1139 = vmatprep.subr.bf16.mxu0 0
        %1140 = vmatpush1.bf16.msra.mxu0 0
        %1141 = vmatprep.subr.bf16.mxu0 0
        %1142 = vmatpush1.bf16.msra.mxu0 0
        %1143 = vmatprep.subr.bf16.mxu0 0
        %1144 = vmatpush1.bf16.msra.mxu0 0
        %1145 = vmatprep.subr.bf16.mxu0 0
        %1146 = vmatpush1.bf16.msra.mxu0 0
        %1147 = vmatprep.subr.bf16.mxu0 0
        %1148 = vmatpush1.bf16.msra.mxu0 0
        %1149 = vmatprep.subr.bf16.mxu0 0
        %1150 = vmatpush1.bf16.msra.mxu0 0
        %1151 = vmatprep.subr.bf16.mxu0 0
        %1152 = vmatpush1.bf16.msra.mxu0 0
        %1153 = vmatprep.subr.bf16.mxu0 0
        %1154 = vmatpush1.bf16.msra.mxu0 0
        %1155 = vmatprep.subr.bf16.mxu0 0
        %1156 = vmatpush1.bf16.msra.mxu0 0
        %1157 = vmatprep.subr.bf16.mxu0 0
        %1158 = vmatpush1.bf16.msra.mxu0 0
        %1159 = vmatprep.subr.bf16.mxu0 0
        %1160 = vmatpush1.bf16.msra.mxu0 0
        %1161 = vmatprep.mubr.bf16.mxu0 0
        %1162 = vmatmul.mubr.bf16.gmra.mrb[0].mxu0 %v1124
        %v1163 = vpop.f32.mrb[0].mxu0
        %v1164 = vadd.f32 0.0, %v1163
        %v1165 = vpop.f32.mrb[0].mxu0
        %v1166 = vpop.f32.mrb[0].mxu0
        %v1167 = vpop.f32.mrb[0].mxu0
        %1168 = vdwg.mxu0
        %1170 = vrot.lane.b32.xlu0 %v1164, 64
        %v1171 = vpop.permute.xlu0 %1170
        %vm1173 = vcmask 785920
        %1174 = vst.msk [vmem:[#allocation2] sm:$0xff] %vm1173, %v1171
        %1175 = vrot.lane.b32.xlu0 %v829, 32
        %v1176 = vpop.permute.xlu0 %1175
        %1177 = vrot.lane.b32.xlu0 %v830, 32
        %v1178 = vpop.permute.xlu0 %1177
        %v1180 = vsel %vm832, %v1176, 0
        %v1183 = vsel %vm832, %v1178, 0
        %1185 = vmatprep.subr.bf16.mxu0 0
        %1186 = vmatpush1.bf16.xpose.msra.mxu0 %v1183
        %1187 = vmatprep.subr.bf16.mxu0 0
        %1188 = vmatpush1.bf16.xpose.msra.mxu0 0
        %1189 = vmatprep.subr.bf16.mxu0 0
        %1190 = vmatpush1.bf16.xpose.msra.mxu0 0
        %1191 = vmatprep.subr.bf16.mxu0 0
        %1192 = vmatpush1.bf16.xpose.msra.mxu0 0
        %1193 = vmatprep.subr.bf16.mxu0 0
        %1194 = vmatpush1.bf16.xpose.msra.mxu0 0
        %1195 = vmatprep.subr.bf16.mxu0 0
        %1196 = vmatpush1.bf16.xpose.msra.mxu0 0
        %1197 = vmatprep.subr.bf16.mxu0 0
        %1198 = vmatpush1.bf16.xpose.msra.mxu0 0
        %1199 = vmatprep.subr.bf16.mxu0 0
        %1200 = vmatpush1.bf16.xpose.msra.mxu0 0
        %1201 = vmatprep.subr.bf16.mxu0 0
        %1202 = vmatpush1.bf16.xpose.msra.mxu0 0
        %1203 = vmatprep.subr.bf16.mxu0 0
        %1204 = vmatpush1.bf16.xpose.msra.mxu0 0
        %1205 = vmatprep.subr.bf16.mxu0 0
        %1206 = vmatpush1.bf16.xpose.msra.mxu0 0
        %1207 = vmatprep.subr.bf16.mxu0 0
        %1208 = vmatpush1.bf16.xpose.msra.mxu0 0
        %1209 = vmatprep.subr.bf16.mxu0 0
        %1210 = vmatpush1.bf16.xpose.msra.mxu0 0
        %1211 = vmatprep.subr.bf16.mxu0 0
        %1212 = vmatpush1.bf16.xpose.msra.mxu0 0
        %1213 = vmatprep.subr.bf16.mxu0 0
        %1214 = vmatpush1.bf16.xpose.msra.mxu0 0
        %1215 = vmatprep.subr.bf16.mxu0 0
        %1216 = vmatpush1.bf16.xpose.msra.mxu0 0
        %1217 = vmatprep.mubr.bf16.mxu0 0
        %1218 = vmatmul.mubr.bf16.gmra.mrb[0].mxu0 %v1180
        %v1219 = vpop.f32.mrb[0].mxu0
        %v1220 = vadd.f32 0.0, %v1219
        %v1221 = vpop.f32.mrb[0].mxu0
        %v1222 = vpop.f32.mrb[0].mxu0
        %v1223 = vpop.f32.mrb[0].mxu0
        %1224 = vdwg.mxu0
        %v1225 = vsel %vm879, %v1220, -inf
        %1226 = vmax.xlane.f32.xlu0 %v1225
        %v1227 = vpop.xlane.xlu0 %1226
        %v1228 = vsub.f32 %v1220, %v1227
        %v1229 = vmul.f32 %v1228, 1.442695
        %v1230 = vpow.pop %v1229
        %v1231 = vsel %vm879, %v1230, 0.0
        %1232 = vadd.xlane.f32.xlu0 %v1231
        %v1233 = vpop.xlane.xlu0 %1232
        %v1234 = vrcp.pop %v1233
        %v1235 = vmul.f32 %v1230, %v1234
        %v1236 = vpack.c.bf16 %v1235, %v1235
        %1237 = vrot.lane.b32.xlu0 %v831, 32
        %v1238 = vpop.permute.xlu0 %1237
        %v1240 = vsel %vm879, %v1236, 0
        %v1243 = vsel %vm895, %v1238, 0
        %1245 = vmatprep.subr.bf16.mxu0 0
        %1246 = vmatpush1.bf16.msra.mxu0 %v1243
        %1247 = vmatprep.subr.bf16.mxu0 0
        %1248 = vmatpush1.bf16.msra.mxu0 0
        %1249 = vmatprep.subr.bf16.mxu0 0
        %1250 = vmatpush1.bf16.msra.mxu0 0
        %1251 = vmatprep.subr.bf16.mxu0 0
        %1252 = vmatpush1.bf16.msra.mxu0 0
        %1253 = vmatprep.subr.bf16.mxu0 0
        %1254 = vmatpush1.bf16.msra.mxu0 0
        %1255 = vmatprep.subr.bf16.mxu0 0
        %1256 = vmatpush1.bf16.msra.mxu0 0
        %1257 = vmatprep.subr.bf16.mxu0 0
        %1258 = vmatpush1.bf16.msra.mxu0 0
        %1259 = vmatprep.subr.bf16.mxu0 0
        %1260 = vmatpush1.bf16.msra.mxu0 0
        %1261 = vmatprep.subr.bf16.mxu0 0
        %1262 = vmatpush1.bf16.msra.mxu0 0
        %1263 = vmatprep.subr.bf16.mxu0 0
        %1264 = vmatpush1.bf16.msra.mxu0 0
        %1265 = vmatprep.subr.bf16.mxu0 0
        %1266 = vmatpush1.bf16.msra.mxu0 0
        %1267 = vmatprep.subr.bf16.mxu0 0
        %1268 = vmatpush1.bf16.msra.mxu0 0
        %1269 = vmatprep.subr.bf16.mxu0 0
        %1270 = vmatpush1.bf16.msra.mxu0 0
        %1271 = vmatprep.subr.bf16.mxu0 0
        %1272 = vmatpush1.bf16.msra.mxu0 0
        %1273 = vmatprep.subr.bf16.mxu0 0
        %1274 = vmatpush1.bf16.msra.mxu0 0
        %1275 = vmatprep.subr.bf16.mxu0 0
        %1276 = vmatpush1.bf16.msra.mxu0 0
        %1277 = vmatprep.mubr.bf16.mxu0 0
        %1278 = vmatmul.mubr.bf16.gmra.mrb[0].mxu0 %v1240
        %v1279 = vpop.f32.mrb[0].mxu0
        %v1280 = vadd.f32 0.0, %v1279
        %v1281 = vpop.f32.mrb[0].mxu0
        %v1282 = vpop.f32.mrb[0].mxu0
        %v1283 = vpop.f32.mrb[0].mxu0
        %1284 = vdwg.mxu0
        %1286 = vrot.lane.b32.xlu0 %v1280, 96
        %v1287 = vpop.permute.xlu0 %1286
        %vm1289 = vcmask 1048320
        %1290 = vst.msk [vmem:[#allocation2] sm:$0xff] %vm1289, %v1287
        %v1291 = vld [vmem:[#allocation2] sm:$0xff]
        %v1292 = vpack.c.bf16 %v1291, %v1291
        %v1293 = vld [vmem:[#allocation11] sm:$0xf]
        %v1294 = vld [vmem:[#allocation11 + $0x4] sm:$0xf]
        %v1295 = vld [vmem:[#allocation11 + $0x8] sm:$0xf]
        %v1296 = vld [vmem:[#allocation11 + $0xc] sm:$0xf]
        %v1297 = vld [vmem:[#allocation11 + $0x10] sm:$0xf]
        %v1298 = vld [vmem:[#allocation11 + $0x14] sm:$0xf]
        %v1299 = vld [vmem:[#allocation11 + $0x18] sm:$0xf]
        %v1300 = vld [vmem:[#allocation11 + $0x1c] sm:$0xf]
        %v1301 = vld [vmem:[#allocation11 + $0x20] sm:$0xf]
        %v1302 = vld [vmem:[#allocation11 + $0x24] sm:$0xf]
        %v1303 = vld [vmem:[#allocation11 + $0x28] sm:$0xf]
        %v1304 = vld [vmem:[#allocation11 + $0x2c] sm:$0xf]
        %v1305 = vld [vmem:[#allocation11 + $0x30] sm:$0xf]
        %v1306 = vld [vmem:[#allocation11 + $0x34] sm:$0xf]
        %v1307 = vld [vmem:[#allocation11 + $0x38] sm:$0xf]
        %v1308 = vld [vmem:[#allocation11 + $0x3c] sm:$0xf]
        %v1309 = vld [vmem:[%s6] sm:$0x1]
        %v1311 = vlaneseq
        %v1312 = vshrl.u32 %v1311, 7
        %v1313 = vsub.s32 0, %v1312
        %v1314 = vrot.slane %v1309, %v1313
        %v1332 = vunpack.c.l.b16 %v1293
        %v1333 = vunpack.c.l.b16 %v1294
        %v1334 = vunpack.c.l.b16 %v1295
        %v1335 = vunpack.c.l.b16 %v1296
        %v1336 = vunpack.c.l.b16 %v1297
        %v1337 = vunpack.c.l.b16 %v1298
        %v1338 = vunpack.c.l.b16 %v1299
        %v1339 = vunpack.c.l.b16 %v1300
        %v1340 = vunpack.c.l.b16 %v1301
        %v1341 = vunpack.c.l.b16 %v1302
        %v1342 = vunpack.c.l.b16 %v1303
        %v1343 = vunpack.c.l.b16 %v1304
        %v1344 = vunpack.c.l.b16 %v1305
        %v1345 = vunpack.c.l.b16 %v1306
        %v1346 = vunpack.c.l.b16 %v1307
        %v1347 = vunpack.c.l.b16 %v1308
        %v1348 = vpack.c.b16 %v1333, %v1332
        %v1349 = vpack.c.b16 %v1335, %v1334
        %v1350 = vpack.c.b16 %v1337, %v1336
        %v1351 = vpack.c.b16 %v1339, %v1338
        %v1352 = vpack.c.b16 %v1341, %v1340
        %v1353 = vpack.c.b16 %v1343, %v1342
        %v1354 = vpack.c.b16 %v1345, %v1344
        %v1355 = vpack.c.b16 %v1347, %v1346
        %1364 = vmatprep.subr.bf16.mxu0 0
        %1365 = vmatpush1.bf16.msra.mxu0 %v1348
        %1366 = vmatprep.subr.bf16.mxu0 0
        %1367 = vmatpush1.bf16.msra.mxu0 %v1349
        %1368 = vmatprep.subr.bf16.mxu0 0
        %1369 = vmatpush1.bf16.msra.mxu0 %v1350
        %1370 = vmatprep.subr.bf16.mxu0 0
        %1371 = vmatpush1.bf16.msra.mxu0 %v1351
        %1372 = vmatprep.subr.bf16.mxu0 0
        %1373 = vmatpush1.bf16.msra.mxu0 %v1352
        %1374 = vmatprep.subr.bf16.mxu0 0
        %1375 = vmatpush1.bf16.msra.mxu0 %v1353
        %1376 = vmatprep.subr.bf16.mxu0 0
        %1377 = vmatpush1.bf16.msra.mxu0 %v1354
        %1378 = vmatprep.subr.bf16.mxu0 0
        %1379 = vmatpush1.bf16.msra.mxu0 %v1355
        %1380 = vmatprep.subr.bf16.mxu0 0
        %1381 = vmatpush1.bf16.msra.mxu0 0
        %1382 = vmatprep.subr.bf16.mxu0 0
        %1383 = vmatpush1.bf16.msra.mxu0 0
        %1384 = vmatprep.subr.bf16.mxu0 0
        %1385 = vmatpush1.bf16.msra.mxu0 0
        %1386 = vmatprep.subr.bf16.mxu0 0
        %1387 = vmatpush1.bf16.msra.mxu0 0
        %1388 = vmatprep.subr.bf16.mxu0 0
        %1389 = vmatpush1.bf16.msra.mxu0 0
        %1390 = vmatprep.subr.bf16.mxu0 0
        %1391 = vmatpush1.bf16.msra.mxu0 0
        %1392 = vmatprep.subr.bf16.mxu0 0
        %1393 = vmatpush1.bf16.msra.mxu0 0
        %1394 = vmatprep.subr.bf16.mxu0 0
        %1395 = vmatpush1.bf16.msra.mxu0 0
        %1396 = vmatprep.mubr.bf16.mxu0 0
        %1397 = vmatmul.mubr.bf16.gmra.mrb[0].mxu0 %v1292
        %v1398 = vpop.f32.mrb[0].mxu0
        %v1399 = vadd.f32 %v1314, %v1398
        %v1400 = vpop.f32.mrb[0].mxu0
        %v1401 = vpop.f32.mrb[0].mxu0
        %v1402 = vpop.f32.mrb[0].mxu0
        %1403 = vdwg.mxu0
        %v1404 = vadd.f32 %v540, %v1399
        %v1405 = vld [vmem:[%s7] sm:$0x1]
        %v1406 = vld [vmem:[%s8] sm:$0x1]
        %1407 = vadd.xlane.f32.xlu0 %v1404
        %v1408 = vpop.xlane.xlu0 %1407
        %v1409 = vmul.f32 %v1404, %v1404
        %1410 = vadd.xlane.f32.xlu0 %v1409
        %v1411 = vpop.xlane.xlu0 %1410
        %v1412 = vmul.f32 %v1408, 0.0078125
        %v1413 = vmul.f32 %v1411, 0.0078125
        %v1414 = vmul.f32 %v1412, %v1412
        %v1415 = vsub.f32 %v1413, %v1414
        %v1416 = vsub.f32 %v1404, %v1412
        %v1417 = vadd.f32 %v1415, 1e-05
        %v1418 = vrsqrt.pop %v1417
        %v1419 = vmul.f32 %v1416, %v1418
        %v1421 = vlaneseq
        %v1422 = vshrl.u32 %v1421, 7
        %v1423 = vsub.s32 0, %v1422
        %v1424 = vrot.slane %v1405, %v1423
        %v1426 = vmul.f32 %v1419, %v1424
        %v1428 = vlaneseq
        %v1429 = vshrl.u32 %v1428, 7
        %v1430 = vsub.s32 0, %v1429
        %v1431 = vrot.slane %v1406, %v1430
        %v1433 = vadd.f32 %v1426, %v1431
        %v1434 = vpack.c.bf16 %v1433, %v1433
        %v1435 = vld [vmem:[#allocation12] sm:$0xff]
        %v1436 = vld [vmem:[#allocation12 + $0x8] sm:$0xff]
        %v1437 = vld [vmem:[#allocation12 + $0x10] sm:$0xff]
        %v1438 = vld [vmem:[#allocation12 + $0x18] sm:$0xff]
        %v1439 = vld [vmem:[#allocation12 + $0x20] sm:$0xff]
        %v1440 = vld [vmem:[#allocation12 + $0x28] sm:$0xff]
        %v1441 = vld [vmem:[#allocation12 + $0x30] sm:$0xff]
        %v1442 = vld [vmem:[#allocation12 + $0x38] sm:$0xff]
        %v1443 = vld [vmem:[#allocation12 + $0x40] sm:$0xff]
        %v1444 = vld [vmem:[#allocation12 + $0x48] sm:$0xff]
        %v1445 = vld [vmem:[#allocation12 + $0x50] sm:$0xff]
        %v1446 = vld [vmem:[#allocation12 + $0x58] sm:$0xff]
        %v1447 = vld [vmem:[#allocation12 + $0x60] sm:$0xff]
        %v1448 = vld [vmem:[#allocation12 + $0x68] sm:$0xff]
        %v1449 = vld [vmem:[#allocation12 + $0x70] sm:$0xff]
        %v1450 = vld [vmem:[#allocation12 + $0x78] sm:$0xff]
        %v1451 = vld [vmem:[#allocation12 + $0x80] sm:$0xff]
        %v1452 = vld [vmem:[#allocation12 + $0x88] sm:$0xff]
        %v1453 = vld [vmem:[#allocation12 + $0x90] sm:$0xff]
        %v1454 = vld [vmem:[#allocation12 + $0x98] sm:$0xff]
        %v1455 = vld [vmem:[#allocation12 + $0xa0] sm:$0xff]
        %v1456 = vld [vmem:[#allocation12 + $0xa8] sm:$0xff]
        %v1457 = vld [vmem:[#allocation12 + $0xb0] sm:$0xff]
        %v1458 = vld [vmem:[#allocation12 + $0xb8] sm:$0xff]
        %v1459 = vld [vmem:[#allocation12 + $0xc0] sm:$0xff]
        %v1460 = vld [vmem:[#allocation12 + $0xc8] sm:$0xff]
        %v1461 = vld [vmem:[#allocation12 + $0xd0] sm:$0xff]
        %v1462 = vld [vmem:[#allocation12 + $0xd8] sm:$0xff]
        %v1463 = vld [vmem:[#allocation12 + $0xe0] sm:$0xff]
        %v1464 = vld [vmem:[#allocation12 + $0xe8] sm:$0xff]
        %v1465 = vld [vmem:[#allocation12 + $0xf0] sm:$0xff]
        %v1466 = vld [vmem:[#allocation12 + $0xf8] sm:$0xff]
        %v1467 = vld [vmem:[%s10] sm:$0xf]
        %v1469 = vlaneseq
        %v1470 = vshrl.u32 %v1469, 7
        %v1471 = vsub.s32 0, %v1470
        %v1472 = vrot.slane %v1467, %v1471
        %v1473 = vlaneseq
        %v1474 = vshrl.u32 %v1473, 7
        %v1475 = vsub.s32 1, %v1474
        %v1476 = vrot.slane %v1467, %v1475
        %v1477 = vlaneseq
        %v1478 = vshrl.u32 %v1477, 7
        %v1479 = vsub.s32 2, %v1478
        %v1480 = vrot.slane %v1467, %v1479
        %v1481 = vlaneseq
        %v1482 = vshrl.u32 %v1481, 7
        %v1483 = vsub.s32 3, %v1482
        %v1484 = vrot.slane %v1467, %v1483
        %v1521 = vunpack.c.l.b16 %v1435
        %v1522 = vunpack.c.h.b16 %v1435
        %v1523 = vunpack.c.l.b16 %v1436
        %v1524 = vunpack.c.h.b16 %v1436
        %v1525 = vunpack.c.l.b16 %v1437
        %v1526 = vunpack.c.h.b16 %v1437
        %v1527 = vunpack.c.l.b16 %v1438
        %v1528 = vunpack.c.h.b16 %v1438
        %v1529 = vunpack.c.l.b16 %v1439
        %v1530 = vunpack.c.h.b16 %v1439
        %v1531 = vunpack.c.l.b16 %v1440
        %v1532 = vunpack.c.h.b16 %v1440
        %v1533 = vunpack.c.l.b16 %v1441
        %v1534 = vunpack.c.h.b16 %v1441
        %v1535 = vunpack.c.l.b16 %v1442
        %v1536 = vunpack.c.h.b16 %v1442
        %v1537 = vunpack.c.l.b16 %v1443
        %v1538 = vunpack.c.h.b16 %v1443
        %v1539 = vunpack.c.l.b16 %v1444
        %v1540 = vunpack.c.h.b16 %v1444
        %v1541 = vunpack.c.l.b16 %v1445
        %v1542 = vunpack.c.h.b16 %v1445
        %v1543 = vunpack.c.l.b16 %v1446
        %v1544 = vunpack.c.h.b16 %v1446
        %v1545 = vunpack.c.l.b16 %v1447
        %v1546 = vunpack.c.h.b16 %v1447
        %v1547 = vunpack.c.l.b16 %v1448
        %v1548 = vunpack.c.h.b16 %v1448
        %v1549 = vunpack.c.l.b16 %v1449
        %v1550 = vunpack.c.h.b16 %v1449
        %v1551 = vunpack.c.l.b16 %v1450
        %v1552 = vunpack.c.h.b16 %v1450
        %v1553 = vunpack.c.l.b16 %v1451
        %v1554 = vunpack.c.h.b16 %v1451
        %v1555 = vunpack.c.l.b16 %v1452
        %v1556 = vunpack.c.h.b16 %v1452
        %v1557 = vunpack.c.l.b16 %v1453
        %v1558 = vunpack.c.h.b16 %v1453
        %v1559 = vunpack.c.l.b16 %v1454
        %v1560 = vunpack.c.h.b16 %v1454
        %v1561 = vunpack.c.l.b16 %v1455
        %v1562 = vunpack.c.h.b16 %v1455
        %v1563 = vunpack.c.l.b16 %v1456
        %v1564 = vunpack.c.h.b16 %v1456
        %v1565 = vunpack.c.l.b16 %v1457
        %v1566 = vunpack.c.h.b16 %v1457
        %v1567 = vunpack.c.l.b16 %v1458
        %v1568 = vunpack.c.h.b16 %v1458
        %v1569 = vunpack.c.l.b16 %v1459
        %v1570 = vunpack.c.h.b16 %v1459
        %v1571 = vunpack.c.l.b16 %v1460
        %v1572 = vunpack.c.h.b16 %v1460
        %v1573 = vunpack.c.l.b16 %v1461
        %v1574 = vunpack.c.h.b16 %v1461
        %v1575 = vunpack.c.l.b16 %v1462
        %v1576 = vunpack.c.h.b16 %v1462
        %v1577 = vunpack.c.l.b16 %v1463
        %v1578 = vunpack.c.h.b16 %v1463
        %v1579 = vunpack.c.l.b16 %v1464
        %v1580 = vunpack.c.h.b16 %v1464
        %v1581 = vunpack.c.l.b16 %v1465
        %v1582 = vunpack.c.h.b16 %v1465
        %v1583 = vunpack.c.l.b16 %v1466
        %v1584 = vunpack.c.h.b16 %v1466
        %v1585 = vpack.c.b16 %v1525, %v1521
        %v1586 = vpack.c.b16 %v1526, %v1522
        %v1587 = vpack.c.b16 %v1527, %v1523
        %v1588 = vpack.c.b16 %v1528, %v1524
        %v1589 = vpack.c.b16 %v1533, %v1529
        %v1590 = vpack.c.b16 %v1534, %v1530
        %v1591 = vpack.c.b16 %v1535, %v1531
        %v1592 = vpack.c.b16 %v1536, %v1532
        %v1593 = vpack.c.b16 %v1541, %v1537
        %v1594 = vpack.c.b16 %v1542, %v1538
        %v1595 = vpack.c.b16 %v1543, %v1539
        %v1596 = vpack.c.b16 %v1544, %v1540
        %v1597 = vpack.c.b16 %v1549, %v1545
        %v1598 = vpack.c.b16 %v1550, %v1546
        %v1599 = vpack.c.b16 %v1551, %v1547
        %v1600 = vpack.c.b16 %v1552, %v1548
        %v1601 = vpack.c.b16 %v1557, %v1553
        %v1602 = vpack.c.b16 %v1558, %v1554
        %v1603 = vpack.c.b16 %v1559, %v1555
        %v1604 = vpack.c.b16 %v1560, %v1556
        %v1605 = vpack.c.b16 %v1565, %v1561
        %v1606 = vpack.c.b16 %v1566, %v1562
        %v1607 = vpack.c.b16 %v1567, %v1563
        %v1608 = vpack.c.b16 %v1568, %v1564
        %v1609 = vpack.c.b16 %v1573, %v1569
        %v1610 = vpack.c.b16 %v1574, %v1570
        %v1611 = vpack.c.b16 %v1575, %v1571
        %v1612 = vpack.c.b16 %v1576, %v1572
        %v1613 = vpack.c.b16 %v1581, %v1577
        %v1614 = vpack.c.b16 %v1582, %v1578
        %v1615 = vpack.c.b16 %v1583, %v1579
        %v1616 = vpack.c.b16 %v1584, %v1580
        %1649 = vmatprep.subr.bf16.mxu0 %v1586
        %1650 = vmatpush1.bf16.msra.mxu0 %v1585
        %1651 = vmatprep.subr.bf16.mxu0 %v1590
        %1652 = vmatpush1.bf16.msra.mxu0 %v1589
        %1653 = vmatprep.subr.bf16.mxu0 %v1594
        %1654 = vmatpush1.bf16.msra.mxu0 %v1593
        %1655 = vmatprep.subr.bf16.mxu0 %v1598
        %1656 = vmatpush1.bf16.msra.mxu0 %v1597
        %1657 = vmatprep.subr.bf16.mxu0 %v1602
        %1658 = vmatpush1.bf16.msra.mxu0 %v1601
        %1659 = vmatprep.subr.bf16.mxu0 %v1606
        %1660 = vmatpush1.bf16.msra.mxu0 %v1605
        %1661 = vmatprep.subr.bf16.mxu0 %v1610
        %1662 = vmatpush1.bf16.msra.mxu0 %v1609
        %1663 = vmatprep.subr.bf16.mxu0 %v1614
        %1664 = vmatpush1.bf16.msra.mxu0 %v1613
        %1665 = vmatprep.subr.bf16.mxu0 0
        %1666 = vmatpush1.bf16.msra.mxu0 0
        %1667 = vmatprep.subr.bf16.mxu0 0
        %1668 = vmatpush1.bf16.msra.mxu0 0
        %1669 = vmatprep.subr.bf16.mxu0 0
        %1670 = vmatpush1.bf16.msra.mxu0 0
        %1671 = vmatprep.subr.bf16.mxu0 0
        %1672 = vmatpush1.bf16.msra.mxu0 0
        %1673 = vmatprep.subr.bf16.mxu0 0
        %1674 = vmatpush1.bf16.msra.mxu0 0
        %1675 = vmatprep.subr.bf16.mxu0 0
        %1676 = vmatpush1.bf16.msra.mxu0 0
        %1677 = vmatprep.subr.bf16.mxu0 0
        %1678 = vmatpush1.bf16.msra.mxu0 0
        %1679 = vmatprep.subr.bf16.mxu0 0
        %1680 = vmatpush1.bf16.msra.mxu0 0
        %1681 = vmatprep.mubr.bf16.mxu0 0
        %1682 = vmatmul.mubr.bf16.gmra.mrb[0].mxu0 %v1434
        %v1683 = vpop.f32.mrb[0].mxu0
        %v1684 = vadd.f32 %v1472, %v1683
        %v1685 = vpop.f32.mrb[0].mxu0
        %v1686 = vadd.f32 %v1476, %v1685
        %v1687 = vpop.f32.mrb[0].mxu0
        %v1688 = vpop.f32.mrb[0].mxu0
        %1689 = vdwg.mxu0
        %1690 = vmatprep.subr.bf16.mxu0 %v1588
        %1691 = vmatpush1.bf16.msra.mxu0 %v1587
        %1692 = vmatprep.subr.bf16.mxu0 %v1592
        %1693 = vmatpush1.bf16.msra.mxu0 %v1591
        %1694 = vmatprep.subr.bf16.mxu0 %v1596
        %1695 = vmatpush1.bf16.msra.mxu0 %v1595
        %1696 = vmatprep.subr.bf16.mxu0 %v1600
        %1697 = vmatpush1.bf16.msra.mxu0 %v1599
        %1698 = vmatprep.subr.bf16.mxu0 %v1604
        %1699 = vmatpush1.bf16.msra.mxu0 %v1603
        %1700 = vmatprep.subr.bf16.mxu0 %v1608
        %1701 = vmatpush1.bf16.msra.mxu0 %v1607
        %1702 = vmatprep.subr.bf16.mxu0 %v1612
        %1703 = vmatpush1.bf16.msra.mxu0 %v1611
        %1704 = vmatprep.subr.bf16.mxu0 %v1616
        %1705 = vmatpush1.bf16.msra.mxu0 %v1615
        %1706 = vmatprep.subr.bf16.mxu0 0
        %1707 = vmatpush1.bf16.msra.mxu0 0
        %1708 = vmatprep.subr.bf16.mxu0 0
        %1709 = vmatpush1.bf16.msra.mxu0 0
        %1710 = vmatprep.subr.bf16.mxu0 0
        %1711 = vmatpush1.bf16.msra.mxu0 0
        %1712 = vmatprep.subr.bf16.mxu0 0
        %1713 = vmatpush1.bf16.msra.mxu0 0
        %1714 = vmatprep.subr.bf16.mxu0 0
        %1715 = vmatpush1.bf16.msra.mxu0 0
        %1716 = vmatprep.subr.bf16.mxu0 0
        %1717 = vmatpush1.bf16.msra.mxu0 0
        %1718 = vmatprep.subr.bf16.mxu0 0
        %1719 = vmatpush1.bf16.msra.mxu0 0
        %1720 = vmatprep.subr.bf16.mxu0 0
        %1721 = vmatpush1.bf16.msra.mxu0 0
        %1722 = vmatprep.mubr.bf16.mxu0 0
        %1723 = vmatmul.mubr.bf16.gmra.mrb[0].mxu0 %v1434
        %v1724 = vpop.f32.mrb[0].mxu0
        %v1725 = vadd.f32 %v1480, %v1724
        %v1726 = vpop.f32.mrb[0].mxu0
        %v1727 = vadd.f32 %v1484, %v1726
        %v1728 = vpop.f32.mrb[0].mxu0
        %v1729 = vpop.f32.mrb[0].mxu0
        %1730 = vdwg.mxu0
        %v1731 = vmax.f32 %v1684, 0.0
        %v1732 = vmax.f32 %v1686, 0.0
        %v1733 = vmax.f32 %v1725, 0.0
        %v1734 = vmax.f32 %v1727, 0.0
        %v1735 = vpack.c.bf16 %v1731, %v1731
        %v1736 = vpack.c.bf16 %v1732, %v1732
        %v1737 = vpack.c.bf16 %v1733, %v1733
        %v1738 = vpack.c.bf16 %v1734, %v1734
        %v1739 = vld [vmem:[#allocation14] sm:$0xf]
        %v1740 = vld [vmem:[#allocation14 + $0x4] sm:$0xf]
        %v1741 = vld [vmem:[#allocation14 + $0x8] sm:$0xf]
        %v1742 = vld [vmem:[#allocation14 + $0xc] sm:$0xf]
        %v1743 = vld [vmem:[#allocation14 + $0x10] sm:$0xf]
        %v1744 = vld [vmem:[#allocation14 + $0x14] sm:$0xf]
        %v1745 = vld [vmem:[#allocation14 + $0x18] sm:$0xf]
        %v1746 = vld [vmem:[#allocation14 + $0x1c] sm:$0xf]
        %v1747 = vld [vmem:[#allocation14 + $0x20] sm:$0xf]
        %v1748 = vld [vmem:[#allocation14 + $0x24] sm:$0xf]
        %v1749 = vld [vmem:[#allocation14 + $0x28] sm:$0xf]
        %v1750 = vld [vmem:[#allocation14 + $0x2c] sm:$0xf]
        %v1751 = vld [vmem:[#allocation14 + $0x30] sm:$0xf]
        %v1752 = vld [vmem:[#allocation14 + $0x34] sm:$0xf]
        %v1753 = vld [vmem:[#allocation14 + $0x38] sm:$0xf]
        %v1754 = vld [vmem:[#allocation14 + $0x3c] sm:$0xf]
        %v1755 = vld [vmem:[#allocation14 + $0x40] sm:$0xf]
        %v1756 = vld [vmem:[#allocation14 + $0x44] sm:$0xf]
        %v1757 = vld [vmem:[#allocation14 + $0x48] sm:$0xf]
        %v1758 = vld [vmem:[#allocation14 + $0x4c] sm:$0xf]
        %v1759 = vld [vmem:[#allocation14 + $0x50] sm:$0xf]
        %v1760 = vld [vmem:[#allocation14 + $0x54] sm:$0xf]
        %v1761 = vld [vmem:[#allocation14 + $0x58] sm:$0xf]
        %v1762 = vld [vmem:[#allocation14 + $0x5c] sm:$0xf]
        %v1763 = vld [vmem:[#allocation14 + $0x60] sm:$0xf]
        %v1764 = vld [vmem:[#allocation14 + $0x64] sm:$0xf]
        %v1765 = vld [vmem:[#allocation14 + $0x68] sm:$0xf]
        %v1766 = vld [vmem:[#allocation14 + $0x6c] sm:$0xf]
        %v1767 = vld [vmem:[#allocation14 + $0x70] sm:$0xf]
        %v1768 = vld [vmem:[#allocation14 + $0x74] sm:$0xf]
        %v1769 = vld [vmem:[#allocation14 + $0x78] sm:$0xf]
        %v1770 = vld [vmem:[#allocation14 + $0x7c] sm:$0xf]
        %v1771 = vld [vmem:[#allocation14 + $0x80] sm:$0xf]
        %v1772 = vld [vmem:[#allocation14 + $0x84] sm:$0xf]
        %v1773 = vld [vmem:[#allocation14 + $0x88] sm:$0xf]
        %v1774 = vld [vmem:[#allocation14 + $0x8c] sm:$0xf]
        %v1775 = vld [vmem:[#allocation14 + $0x90] sm:$0xf]
        %v1776 = vld [vmem:[#allocation14 + $0x94] sm:$0xf]
        %v1777 = vld [vmem:[#allocation14 + $0x98] sm:$0xf]
        %v1778 = vld [vmem:[#allocation14 + $0x9c] sm:$0xf]
        %v1779 = vld [vmem:[#allocation14 + $0xa0] sm:$0xf]
        %v1780 = vld [vmem:[#allocation14 + $0xa4] sm:$0xf]
        %v1781 = vld [vmem:[#allocation14 + $0xa8] sm:$0xf]
        %v1782 = vld [vmem:[#allocation14 + $0xac] sm:$0xf]
        %v1783 = vld [vmem:[#allocation14 + $0xb0] sm:$0xf]
        %v1784 = vld [vmem:[#allocation14 + $0xb4] sm:$0xf]
        %v1785 = vld [vmem:[#allocation14 + $0xb8] sm:$0xf]
        %v1786 = vld [vmem:[#allocation14 + $0xbc] sm:$0xf]
        %v1787 = vld [vmem:[#allocation14 + $0xc0] sm:$0xf]
        %v1788 = vld [vmem:[#allocation14 + $0xc4] sm:$0xf]
        %v1789 = vld [vmem:[#allocation14 + $0xc8] sm:$0xf]
        %v1790 = vld [vmem:[#allocation14 + $0xcc] sm:$0xf]
        %v1791 = vld [vmem:[#allocation14 + $0xd0] sm:$0xf]
        %v1792 = vld [vmem:[#allocation14 + $0xd4] sm:$0xf]
        %v1793 = vld [vmem:[#allocation14 + $0xd8] sm:$0xf]
        %v1794 = vld [vmem:[#allocation14 + $0xdc] sm:$0xf]
        %v1795 = vld [vmem:[#allocation14 + $0xe0] sm:$0xf]
        %v1796 = vld [vmem:[#allocation14 + $0xe4] sm:$0xf]
        %v1797 = vld [vmem:[#allocation14 + $0xe8] sm:$0xf]
        %v1798 = vld [vmem:[#allocation14 + $0xec] sm:$0xf]
        %v1799 = vld [vmem:[#allocation14 + $0xf0] sm:$0xf]
        %v1800 = vld [vmem:[#allocation14 + $0xf4] sm:$0xf]
        %v1801 = vld [vmem:[#allocation14 + $0xf8] sm:$0xf]
        %v1802 = vld [vmem:[#allocation14 + $0xfc] sm:$0xf]
        %v1803 = vld [vmem:[%s12] sm:$0x1]
        %v1805 = vlaneseq
        %v1806 = vshrl.u32 %v1805, 7
        %v1807 = vsub.s32 0, %v1806
        %v1808 = vrot.slane %v1803, %v1807
        %v1874 = vunpack.c.l.b16 %v1739
        %v1875 = vunpack.c.l.b16 %v1740
        %v1876 = vunpack.c.l.b16 %v1741
        %v1877 = vunpack.c.l.b16 %v1742
        %v1878 = vunpack.c.l.b16 %v1743
        %v1879 = vunpack.c.l.b16 %v1744
        %v1880 = vunpack.c.l.b16 %v1745
        %v1881 = vunpack.c.l.b16 %v1746
        %v1882 = vunpack.c.l.b16 %v1747
        %v1883 = vunpack.c.l.b16 %v1748
        %v1884 = vunpack.c.l.b16 %v1749
        %v1885 = vunpack.c.l.b16 %v1750
        %v1886 = vunpack.c.l.b16 %v1751
        %v1887 = vunpack.c.l.b16 %v1752
        %v1888 = vunpack.c.l.b16 %v1753
        %v1889 = vunpack.c.l.b16 %v1754
        %v1890 = vunpack.c.l.b16 %v1755
        %v1891 = vunpack.c.l.b16 %v1756
        %v1892 = vunpack.c.l.b16 %v1757
        %v1893 = vunpack.c.l.b16 %v1758
        %v1894 = vunpack.c.l.b16 %v1759
        %v1895 = vunpack.c.l.b16 %v1760
        %v1896 = vunpack.c.l.b16 %v1761
        %v1897 = vunpack.c.l.b16 %v1762
        %v1898 = vunpack.c.l.b16 %v1763
        %v1899 = vunpack.c.l.b16 %v1764
        %v1900 = vunpack.c.l.b16 %v1765
        %v1901 = vunpack.c.l.b16 %v1766
        %v1902 = vunpack.c.l.b16 %v1767
        %v1903 = vunpack.c.l.b16 %v1768
        %v1904 = vunpack.c.l.b16 %v1769
        %v1905 = vunpack.c.l.b16 %v1770
        %v1906 = vunpack.c.l.b16 %v1771
        %v1907 = vunpack.c.l.b16 %v1772
        %v1908 = vunpack.c.l.b16 %v1773
        %v1909 = vunpack.c.l.b16 %v1774
        %v1910 = vunpack.c.l.b16 %v1775
        %v1911 = vunpack.c.l.b16 %v1776
        %v1912 = vunpack.c.l.b16 %v1777
        %v1913 = vunpack.c.l.b16 %v1778
        %v1914 = vunpack.c.l.b16 %v1779
        %v1915 = vunpack.c.l.b16 %v1780
        %v1916 = vunpack.c.l.b16 %v1781
        %v1917 = vunpack.c.l.b16 %v1782
        %v1918 = vunpack.c.l.b16 %v1783
        %v1919 = vunpack.c.l.b16 %v1784
        %v1920 = vunpack.c.l.b16 %v1785
        %v1921 = vunpack.c.l.b16 %v1786
        %v1922 = vunpack.c.l.b16 %v1787
        %v1923 = vunpack.c.l.b16 %v1788
        %v1924 = vunpack.c.l.b16 %v1789
        %v1925 = vunpack.c.l.b16 %v1790
        %v1926 = vunpack.c.l.b16 %v1791
        %v1927 = vunpack.c.l.b16 %v1792
        %v1928 = vunpack.c.l.b16 %v1793
        %v1929 = vunpack.c.l.b16 %v1794
        %v1930 = vunpack.c.l.b16 %v1795
        %v1931 = vunpack.c.l.b16 %v1796
        %v1932 = vunpack.c.l.b16 %v1797
        %v1933 = vunpack.c.l.b16 %v1798
        %v1934 = vunpack.c.l.b16 %v1799
        %v1935 = vunpack.c.l.b16 %v1800
        %v1936 = vunpack.c.l.b16 %v1801
        %v1937 = vunpack.c.l.b16 %v1802
        %v1938 = vpack.c.b16 %v1875, %v1874
        %v1939 = vpack.c.b16 %v1877, %v1876
        %v1940 = vpack.c.b16 %v1879, %v1878
        %v1941 = vpack.c.b16 %v1881, %v1880
        %v1942 = vpack.c.b16 %v1883, %v1882
        %v1943 = vpack.c.b16 %v1885, %v1884
        %v1944 = vpack.c.b16 %v1887, %v1886
        %v1945 = vpack.c.b16 %v1889, %v1888
        %v1946 = vpack.c.b16 %v1891, %v1890
        %v1947 = vpack.c.b16 %v1893, %v1892
        %v1948 = vpack.c.b16 %v1895, %v1894
        %v1949 = vpack.c.b16 %v1897, %v1896
        %v1950 = vpack.c.b16 %v1899, %v1898
        %v1951 = vpack.c.b16 %v1901, %v1900
        %v1952 = vpack.c.b16 %v1903, %v1902
        %v1953 = vpack.c.b16 %v1905, %v1904
        %v1954 = vpack.c.b16 %v1907, %v1906
        %v1955 = vpack.c.b16 %v1909, %v1908
        %v1956 = vpack.c.b16 %v1911, %v1910
        %v1957 = vpack.c.b16 %v1913, %v1912
        %v1958 = vpack.c.b16 %v1915, %v1914
        %v1959 = vpack.c.b16 %v1917, %v1916
        %v1960 = vpack.c.b16 %v1919, %v1918
        %v1961 = vpack.c.b16 %v1921, %v1920
        %v1962 = vpack.c.b16 %v1923, %v1922
        %v1963 = vpack.c.b16 %v1925, %v1924
        %v1964 = vpack.c.b16 %v1927, %v1926
        %v1965 = vpack.c.b16 %v1929, %v1928
        %v1966 = vpack.c.b16 %v1931, %v1930
        %v1967 = vpack.c.b16 %v1933, %v1932
        %v1968 = vpack.c.b16 %v1935, %v1934
        %v1969 = vpack.c.b16 %v1937, %v1936
        %2002 = vmatprep.subr.bf16.mxu0 0
        %2003 = vmatpush1.bf16.msra.mxu0 %v1938
        %2004 = vmatprep.subr.bf16.mxu0 0
        %2005 = vmatpush1.bf16.msra.mxu0 %v1939
        %2006 = vmatprep.subr.bf16.mxu0 0
        %2007 = vmatpush1.bf16.msra.mxu0 %v1940
        %2008 = vmatprep.subr.bf16.mxu0 0
        %2009 = vmatpush1.bf16.msra.mxu0 %v1941
        %2010 = vmatprep.subr.bf16.mxu0 0
        %2011 = vmatpush1.bf16.msra.mxu0 %v1942
        %2012 = vmatprep.subr.bf16.mxu0 0
        %2013 = vmatpush1.bf16.msra.mxu0 %v1943
        %2014 = vmatprep.subr.bf16.mxu0 0
        %2015 = vmatpush1.bf16.msra.mxu0 %v1944
        %2016 = vmatprep.subr.bf16.mxu0 0
        %2017 = vmatpush1.bf16.msra.mxu0 %v1945
        %2018 = vmatprep.subr.bf16.mxu0 0
        %2019 = vmatpush1.bf16.msra.mxu0 %v1946
        %2020 = vmatprep.subr.bf16.mxu0 0
        %2021 = vmatpush1.bf16.msra.mxu0 %v1947
        %2022 = vmatprep.subr.bf16.mxu0 0
        %2023 = vmatpush1.bf16.msra.mxu0 %v1948
        %2024 = vmatprep.subr.bf16.mxu0 0
        %2025 = vmatpush1.bf16.msra.mxu0 %v1949
        %2026 = vmatprep.subr.bf16.mxu0 0
        %2027 = vmatpush1.bf16.msra.mxu0 %v1950
        %2028 = vmatprep.subr.bf16.mxu0 0
        %2029 = vmatpush1.bf16.msra.mxu0 %v1951
        %2030 = vmatprep.subr.bf16.mxu0 0
        %2031 = vmatpush1.bf16.msra.mxu0 %v1952
        %2032 = vmatprep.subr.bf16.mxu0 0
        %2033 = vmatpush1.bf16.msra.mxu0 %v1953
        %2034 = vmatprep.mubr.bf16.mxu0 %v1736
        %2035 = vmatmul.mubr.bf16.gmra.mrb[0].mxu0 %v1735
        %v2036 = vpop.f32.mrb[0].mxu0
        %v2037 = vadd.f32 %v1808, %v2036
        %v2038 = vpop.f32.mrb[0].mxu0
        %v2039 = vpop.f32.mrb[0].mxu0
        %v2040 = vpop.f32.mrb[0].mxu0
        %2041 = vdwg.mxu0
        %2042 = vmatprep.subr.bf16.mxu0 0
        %2043 = vmatpush1.bf16.msra.mxu0 %v1954
        %2044 = vmatprep.subr.bf16.mxu0 0
        %2045 = vmatpush1.bf16.msra.mxu0 %v1955
        %2046 = vmatprep.subr.bf16.mxu0 0
        %2047 = vmatpush1.bf16.msra.mxu0 %v1956
        %2048 = vmatprep.subr.bf16.mxu0 0
        %2049 = vmatpush1.bf16.msra.mxu0 %v1957
        %2050 = vmatprep.subr.bf16.mxu0 0
        %2051 = vmatpush1.bf16.msra.mxu0 %v1958
        %2052 = vmatprep.subr.bf16.mxu0 0
        %2053 = vmatpush1.bf16.msra.mxu0 %v1959
        %2054 = vmatprep.subr.bf16.mxu0 0
        %2055 = vmatpush1.bf16.msra.mxu0 %v1960
        %2056 = vmatprep.subr.bf16.mxu0 0
        %2057 = vmatpush1.bf16.msra.mxu0 %v1961
        %2058 = vmatprep.subr.bf16.mxu0 0
        %2059 = vmatpush1.bf16.msra.mxu0 %v1962
        %2060 = vmatprep.subr.bf16.mxu0 0
        %2061 = vmatpush1.bf16.msra.mxu0 %v1963
        %2062 = vmatprep.subr.bf16.mxu0 0
        %2063 = vmatpush1.bf16.msra.mxu0 %v1964
        %2064 = vmatprep.subr.bf16.mxu0 0
        %2065 = vmatpush1.bf16.msra.mxu0 %v1965
        %2066 = vmatprep.subr.bf16.mxu0 0
        %2067 = vmatpush1.bf16.msra.mxu0 %v1966
        %2068 = vmatprep.subr.bf16.mxu0 0
        %2069 = vmatpush1.bf16.msra.mxu0 %v1967
        %2070 = vmatprep.subr.bf16.mxu0 0
        %2071 = vmatpush1.bf16.msra.mxu0 %v1968
        %2072 = vmatprep.subr.bf16.mxu0 0
        %2073 = vmatpush1.bf16.msra.mxu0 %v1969
        %2074 = vmatprep.mubr.bf16.mxu0 %v1738
        %2075 = vmatmul.mubr.bf16.gmra.mrb[0].mxu0 %v1737
        %v2076 = vpop.f32.mrb[0].mxu0
        %v2077 = vadd.f32 %v2037, %v2076
        %v2078 = vpop.f32.mrb[0].mxu0
        %v2079 = vpop.f32.mrb[0].mxu0
        %v2080 = vpop.f32.mrb[0].mxu0
        %2081 = vdwg.mxu0
        %v2082 = vadd.f32 %v1404, %v2077
        %2083 = vst [vmem:[%s538] sm:$0xff] %v2082
        %s2084 = sand.u32 %s319, 1
        %s2085 = scalar_lea.sflag [#allocation5], %s2084
        %s2086 = sand.u32 %s319, 1
        %s2087 = smul.addr %s2086, 8
        %s2088 = scalar_lea.vmem [#allocation15], %s2087
        // Predicated region
        $region101: #{transformer_block.1} parent=71 // pred_check
          %p2089 = pneg %p329
        $region102: #{transformer_block.1} parent=71 // pred_check_branch
          %2091 = sbr.rel (%p2089) target = $region104
        $region103: #{transformer_block.1} parent=71 // pred_region
          %s2093 = ssub.s32 128, 128
          %2094 = vsyncadd %s2085, %s2093
          %s2095 = smul.addr %s33, 128
          %s2096 = scalar_lea.hbm %s13, %s2095
          %s2098 = sshll.u32 %s2088, 4
          %s2099 = int_to_ptr.vmem [resolvable:$true] %s2098
          %2101 = dma.vmem_to_hbm [thread:$0]  %s2099, 128, %s2096, %s2085
        $region104: #{transformer_block.1} parent=71 // pred_fallthru
          _
      $region72: #{transformer_block.1} parent=5 // pred_fallthru
        _
      %p2102 = scmp.le.s32.totalorder 2, %s28
      // Predicated region
      $region105: #{transformer_block.1} parent=5 // pred_check
        %p2103 = pneg %p2102
      $region106: #{transformer_block.1} parent=5 // pred_check_branch
        %2105 = sbr.rel (%p2103) target = $region108
      $region107: #{transformer_block.1} parent=5 // pred_region
        %s2106 = ssub.s32 %s28, 2
        // Predicated region
        $region109: #{transformer_block.1} parent=107 // pred_check
          %p2107 = pneg %p335
        $region110: #{transformer_block.1} parent=107 // pred_check_branch
          %2109 = sbr.rel (%p2107) target = $region112
        $region111: #{transformer_block.1} parent=107 // pred_region
          %s2110 = sand.u32 %s320, 1
          %s2111 = scalar_lea.sflag [#allocation5], %s2110
          %s2112 = sand.u32 %s320, 1
          %s2113 = smul.addr %s2112, 8
          %s2114 = scalar_lea.vmem [#allocation15], %s2113
          %2115 = dma.done %s2111, 128
        $region112: #{transformer_block.1} parent=107 // pred_fallthru
          _
      $region108: #{transformer_block.1} parent=5 // pred_fallthru
        _
    $region6: #{transformer_block.1} parent=1 // loop_footer
      %s32 = sadd.s32 1, %s28
    $region7: #{transformer_block.1} parent=1 // loop_footer_branch
      %27 = sbr.rel target = $region3
    $region8: #{transformer_block.1} parent=1 // loop_exit
      _
    %2116 = vsyncpa [#allocation4], 1
    %s2117 = scalar_lea.sflag [#allocation4], 1
    %2118 = vsyncpa %s2117, 1
    %2119 = vsyncpa [#allocation7], 1
    %2120 = vsyncpa [#allocation10], 1
    %2121 = vsyncpa [#allocation13], 1
    %2122 = vsyncpa [#allocation5], 1
    %s2123 = scalar_lea.sflag [#allocation5], 1
    %2124 = vsyncpa %s2123, 1

</llo_original>
